<compile_context>
chip_gen: v7x
topology: tpu7x:2x2x1
jax: 0.10.0
libtpu: 0.0.40
codegen_flags: <defaults>
</compile_context>

<pallas_src>
import functools

import jax
import jax.numpy as jnp
from jax import lax
from jax.experimental import pallas as pl
from jax.experimental.pallas import tpu as pltpu


# -----------------------------------------------------------------------------
# Pallas kernel: one (direction, time-chunk) grid step of the bidirectional LSTM
# -----------------------------------------------------------------------------
def _bilstm_kernel(
    emb_ref,    # (chunk*Bp, H)    bf16/f32   embedding features, time-major rows
    ctx_ref,    # (chunk*Bp, 2H)   bf16/f32   context features
    w_emb_ref,  # (H, 4H)                      W_ih^T rows acting on the embedding
    w_ctx_ref,  # (2H, 4H)                     W_ih^T rows acting on the context
    whh_ref,    # (H, 4H)                      W_hh^T
    b_ref,      # (1, 4H)          f32         b_ih + b_hh
    h0_ref,     # (Bp, H)          f32         initial hidden (this direction)
    c0_ref,     # (Bp, H)          f32         initial cell   (this direction)
    y_ref,      # (chunk*Bp, H)    f32 out     per-step hidden states
    hn_ref,     # (Bp, H)          f32 out     final hidden (also the chunk carry)
    cn_ref,     # (Bp, H)          f32 out     final cell   (also the chunk carry)
    xg_ref,     # (chunk*Bp, 4H)   f32 scratch hoisted input projection
    *,
    chunk: int,
    batch_pad: int,
    hidden: int,
    seq_len: int,
    num_chunks: int,
):
    H = hidden
    Bp = batch_pad
    direction = pl.program_id(0)     # 0 = forward, 1 = reverse
    blk = pl.program_id(1)           # time-chunk counter (per direction)
    padded_time = (num_chunks * chunk != seq_len)

    # Initialize the carried state at the first chunk of each direction. hn/cn
    # output blocks are resident across the "arbitrary" time axis (their block
    # index only depends on the direction), so they double as the h/c carry.
    @pl.when(blk == 0)
    def _init():
        hn_ref[...] = h0_ref[...]
        cn_ref[...] = c0_ref[...]

    # ---- hoisted input projection: one big GEMM per chunk (no recurrent dep) ----
    xg_ref[...] = (
        jnp.dot(emb_ref[...], w_emb_ref[...], preferred_element_type=jnp.float32)
        + jnp.dot(ctx_ref[...], w_ctx_ref[...], preferred_element_type=jnp.float32)
        + b_ref[...]
    )

    whh = whh_ref[...]

    # Global time offset of this block (forward walks blocks left->right,
    # reverse walks right->left; pure integer arithmetic, no select needed).
    t_start = ((1 - direction) * blk + direction * (num_chunks - 1 - blk)) * chunk

    def step(s, carry):
        h, c_cell = carry
        # Local step: forward ascends, reverse descends within the chunk.
        t_local = (1 - direction) * s + direction * (chunk - 1 - s)
        row = pl.multiple_of(t_local * Bp, 8)

        gates = xg_ref[pl.ds(row, Bp), :] + jnp.dot(
            h.astype(whh.dtype), whh, preferred_element_type=jnp.float32)

        i_g = jax.nn.sigmoid(gates[:, 0 * H:1 * H])
        f_g = jax.nn.sigmoid(gates[:, 1 * H:2 * H])
        g_g = jnp.tanh(gates[:, 2 * H:3 * H])
        o_g = jax.nn.sigmoid(gates[:, 3 * H:4 * H])

        c_new = f_g * c_cell + i_g * g_g
        h_new = o_g * jnp.tanh(c_new)

        if padded_time:  # static python branch: only traced when T was padded
            valid = (t_start + t_local) < seq_len
            h_new = jnp.where(valid, h_new, h)
            c_new = jnp.where(valid, c_new, c_cell)

        y_ref[pl.ds(row, Bp), :] = h_new.astype(y_ref.dtype)
        return h_new, c_new

    unroll = True if chunk <= 16 else 4
    h_fin, c_fin = lax.fori_loop(0, chunk, step,
                                 (hn_ref[...], cn_ref[...]), unroll=unroll)
    hn_ref[...] = h_fin
    cn_ref[...] = c_fin


# -----------------------------------------------------------------------------
# Wrapper: embedding gather, padding/layout, pallas_call, output assembly
# -----------------------------------------------------------------------------
def nmt_decoder_ba_forward(params, inputs, context, decoder_hidden_state,
                           decoder_cell_state, *, chunk=None,
                           compute_dtype=jnp.bfloat16):
    """Mirrors NMTDecoderBA.forward (bidirectional=True, num_enc_layers=1).

    inputs:               (B, T) int32 token ids
    context:              (B, T, 2H) float32
    decoder_hidden_state: (2, B, H)  float32
    decoder_cell_state:   (2, B, H)  float32
    returns: output (B, T, 2H), (h_n (2, B, H), c_n (2, B, H))
    """
    H = params["whh"].shape[1]
    B, T = inputs.shape

    # Batch padded to >=8 sublanes -> aligned per-step slices & fuller MXU.
    Bp = max(8, ((B + 7) // 8) * 8)
    if chunk is None:
        chunk = T if T <= 128 else 64          # 64 is a multiple of 8 -> clean tiling
    nc = -(-T // chunk)                        # number of time chunks
    T_pad = nc * chunk

    # Time-major token ids / context (embedding gather lands directly in the
    # time-major layout, so no extra transpose pass over the embeddings).
    idx_t = jnp.transpose(inputs, (1, 0))                       # (T, B)
    ctx_t = jnp.transpose(context, (1, 0, 2))                   # (T, B, 2H)
    if T_pad != T:
        idx_t = jnp.pad(idx_t, ((0, T_pad - T), (0, 0)))
        ctx_t = jnp.pad(ctx_t, ((0, T_pad - T), (0, 0), (0, 0)))
    if Bp != B:
        idx_t = jnp.pad(idx_t, ((0, 0), (0, Bp - B)))
        ctx_t = jnp.pad(ctx_t, ((0, 0), (0, Bp - B), (0, 0)))

    emb_t = jnp.take(params["embedding"], idx_t, axis=0)        # (T_pad, Bp, H)
    emb2d = emb_t.astype(compute_dtype).reshape(T_pad * Bp, H)
    ctx2d = ctx_t.astype(compute_dtype).reshape(T_pad * Bp, 2 * H)

    h0 = decoder_hidden_state.astype(jnp.float32)
    c0 = decoder_cell_state.astype(jnp.float32)
    if Bp != B:
        h0 = jnp.pad(h0, ((0, 0), (0, Bp - B), (0, 0)))
        c0 = jnp.pad(c0, ((0, 0), (0, Bp - B), (0, 0)))

    # forward direction walks time blocks left->right, reverse right->left
    def t_blk(d, c):
        return (1 - d) * c + d * (nc - 1 - c)

    kernel = functools.partial(
        _bilstm_kernel, chunk=chunk, batch_pad=Bp, hidden=H,
        seq_len=T, num_chunks=nc)

    grid_spec = pltpu.PrefetchScalarGridSpec(
        num_scalar_prefetch=0,
        grid=(2, nc),                                     # (direction, time chunk)
        in_specs=[
            pl.BlockSpec((chunk * Bp, H), lambda d, c: (t_blk(d, c), 0)),      # emb
            pl.BlockSpec((chunk * Bp, 2 * H), lambda d, c: (t_blk(d, c), 0)),  # ctx
            pl.BlockSpec((None, H, 4 * H), lambda d, c: (d, 0, 0)),            # w_emb
            pl.BlockSpec((None, 2 * H, 4 * H), lambda d, c: (d, 0, 0)),        # w_ctx
            pl.BlockSpec((None, H, 4 * H), lambda d, c: (d, 0, 0)),            # whh
            pl.BlockSpec((None, 1, 4 * H), lambda d, c: (d, 0, 0)),            # bias
            pl.BlockSpec((None, Bp, H), lambda d, c: (d, 0, 0)),               # h0
            pl.BlockSpec((None, Bp, H), lambda d, c: (d, 0, 0)),               # c0
        ],
        out_specs=(
            pl.BlockSpec((None, chunk * Bp, H), lambda d, c: (d, t_blk(d, c), 0)),  # y
            pl.BlockSpec((None, Bp, H), lambda d, c: (d, 0, 0)),                    # h_n
            pl.BlockSpec((None, Bp, H), lambda d, c: (d, 0, 0)),                    # c_n
        ),
        scratch_shapes=[pltpu.VMEM((chunk * Bp, 4 * H), jnp.float32)],
    )

    # Scoped-VMEM budget: resident weights (one direction, double-buffered) +
    # streamed chunk blocks + scratch, clamped below v7x's 64 MiB physical VMEM.
    itemsize = jnp.dtype(compute_dtype).itemsize
    weight_bytes = 2 * (H * 4 * H + 2 * H * 4 * H + H * 4 * H) * itemsize
    act_bytes = 2 * chunk * Bp * (3 * H * itemsize + H * 4) + chunk * Bp * 4 * H * 4
    vmem_limit = int(min(56 * 1024 * 1024,
                         max(32 * 1024 * 1024, 4 * (weight_bytes + act_bytes))))

    y2, h_n, c_n = pl.pallas_call(
        kernel,
        out_shape=(
            jax.ShapeDtypeStruct((2, T_pad * Bp, H), jnp.float32),
            jax.ShapeDtypeStruct((2, Bp, H), jnp.float32),
            jax.ShapeDtypeStruct((2, Bp, H), jnp.float32),
        ),
        grid_spec=grid_spec,
        compiler_params=pltpu.CompilerParams(
            dimension_semantics=("parallel", "arbitrary"),
            vmem_limit_bytes=vmem_limit,
        ),
    )(
        emb2d, ctx2d,
        params["w_emb"].astype(compute_dtype),
        params["w_ctx"].astype(compute_dtype),
        params["whh"].astype(compute_dtype),
        params["b"].astype(jnp.float32),
        h0, c0,
    )

    # (2, T_pad*Bp, H) -> (B, T, 2H) with [fwd | rev] along the feature axis.
    y = y2.reshape(2, T_pad, Bp, H)[:, :T, :B, :]
    y = jnp.transpose(y, (2, 1, 0, 3)).reshape(B, T, 2 * H)
    return y, (h_n[:, :B, :], c_n[:, :B, :])


# -----------------------------------------------------------------------------
# Pure-JAX reference (for a correctness check against the kernel)
# -----------------------------------------------------------------------------
def _reference_forward(params, inputs, context, h0, c0):
    H = params["whh"].shape[1]
    emb = jnp.take(params["embedding"], inputs, axis=0)          # (B, T, H)
    x = jnp.concatenate([emb, context], axis=-1)                 # (B, T, 3H)
    w_ih = jnp.concatenate([params["w_emb"], params["w_ctx"]], axis=1)  # (2, 3H, 4H)
    xs = jnp.transpose(x, (1, 0, 2))                             # (T, B, 3H)

    def cell(carry, x_t, w_ih_d, w_hh_d, b_d):
        h, c = carry
        g = x_t @ w_ih_d + h @ w_hh_d + b_d
        i = jax.nn.sigmoid(g[:, 0 * H:1 * H])
        f = jax.nn.sigmoid(g[:, 1 * H:2 * H])
        gg = jnp.tanh(g[:, 2 * H:3 * H])
        o = jax.nn.sigmoid(g[:, 3 * H:4 * H])
        c = f * c + i * gg
        h = o * jnp.tanh(c)
        return (h, c), h

    (hf, cf), yf = lax.scan(
        lambda cr, xt: cell(cr, xt, w_ih[0], params["whh"][0], params["b"][0]),
        (h0[0], c0[0]), xs)
    (hr, cr), yr = lax.scan(
        lambda cr, xt: cell(cr, xt, w_ih[1], params["whh"][1], params["b"][1]),
        (h0[1], c0[1]), xs, reverse=True)

    y = jnp.transpose(jnp.concatenate([yf, yr], axis=-1), (1, 0, 2))
    return y, (jnp.stack([hf, hr]), jnp.stack([cf, cr]))


# -----------------------------------------------------------------------------
# Deterministic parameter construction (matches module __init__ shapes)
# -----------------------------------------------------------------------------
def init_params(key, vocab_size, latent_dim):
    H = latent_dim
    ks = jax.random.split(key, 6)
    scale = 1.0 / jnp.sqrt(jnp.float32(H))

    def unif(k, shape):
        return jax.random.uniform(k, shape, jnp.float32, -scale, scale)

    params = {
        # nn.Embedding(vocab_size + 4, latent_dim)
        "embedding": jax.random.normal(ks[0], (vocab_size + 4, H), jnp.float32),
        # W_ih^T split by input-feature blocks (first H rows act on the embedding,
        # last 2H rows on the encoder context), stacked over [forward, reverse].
        "w_emb": unif(ks[1], (2, H, 4 * H)),
        "w_ctx": unif(ks[2], (2, 2 * H, 4 * H)),
        "whh":   unif(ks[3], (2, H, 4 * H)),
        "b":     unif(ks[4], (2, 1, 4 * H)) + unif(ks[5], (2, 1, 4 * H)),  # b_ih + b_hh
    }
    # TODO(synk): num_enc_layers > 1 (stacked LSTM) and dropout>0 not implemented;
    # module defaults are num_enc_layers=1, dropout=0.
    return params


if __name__ == "__main__":
    vocab_size = 16
    latent_dim = 32   # H
    B, T = 2, 8

    key = jax.random.PRNGKey(0)
    k_par, k_in, k_ctx, k_h, k_c = jax.random.split(key, 5)

    params = init_params(k_par, vocab_size, latent_dim)
    inputs = jax.random.randint(k_in, (B, T), 0, vocab_size + 4, jnp.int32)
    context = jax.random.normal(k_ctx, (B, T, 2 * latent_dim), jnp.float32)
    h0 = jax.random.normal(k_h, (2, B, latent_dim), jnp.float32)
    c0 = jax.random.normal(k_c, (2, B, latent_dim), jnp.float32)

    fwd = jax.jit(nmt_decoder_ba_forward,
                  static_argnames=("chunk", "compute_dtype"))

    # Default (bf16 matmul operand) path.
    out, (h_n, c_n) = fwd(params, inputs, context, h0, c0)
    jax.block_until_ready((out, h_n, c_n))
    assert out.shape == (B, T, 2 * latent_dim)
    assert h_n.shape == (2, B, latent_dim)
    assert c_n.shape == (2, B, latent_dim)
    assert bool(jnp.all(jnp.isfinite(out)))

    # f32 path vs. pure-JAX reference (catches indexing/semantic bugs).
    out32, (h32, c32) = fwd(params, inputs, context, h0, c0,
                            compute_dtype=jnp.float32)
    ref_y, (ref_h, ref_c) = jax.jit(_reference_forward)(params, inputs, context,
                                                        h0, c0)
    err = max(float(jnp.max(jnp.abs(out32 - ref_y))),
              float(jnp.max(jnp.abs(h32 - ref_h))),
              float(jnp.max(jnp.abs(c32 - ref_c))))
    assert err < 1e-3, f"kernel mismatch vs reference: {err}"

    print("KERNEL_OK")
</pallas_src>

<mosaic_0001>
module attributes {stable_mosaic.version = 11 : i64} {
  func.func @_bilstm_kernel(%arg0: i32, %arg1: i32, %arg2: memref<64x32xbf16, #tpu.memory_space<vmem>>, %arg3: memref<64x64xbf16, #tpu.memory_space<vmem>>, %arg4: memref<1x32x128xbf16, #tpu.memory_space<vmem>>, %arg5: memref<1x64x128xbf16, #tpu.memory_space<vmem>>, %arg6: memref<1x32x128xbf16, #tpu.memory_space<vmem>>, %arg7: memref<1x1x128xf32, #tpu.memory_space<vmem>>, %arg8: memref<1x8x32xf32, #tpu.memory_space<vmem>>, %arg9: memref<1x8x32xf32, #tpu.memory_space<vmem>>, %arg10: memref<1x64x32xf32, #tpu.memory_space<vmem>>, %arg11: memref<1x8x32xf32, #tpu.memory_space<vmem>>, %arg12: memref<1x8x32xf32, #tpu.memory_space<vmem>>, %arg13: memref<64x128xf32, #tpu.memory_space<vmem>>) attributes {dimension_semantics = [#tpu.dimension_semantics<parallel>, #tpu.dimension_semantics<arbitrary>], iteration_bounds = array<i64: 2, 1>, scalar_prefetch = 0 : i64, scratch_operands = 1 : i64, tpu.core_type = #tpu.core_type<tc>, window_params = [{transform_indices = @transform_0, window_bounds = array<i64: 64, 32>}, {transform_indices = @transform_1, window_bounds = array<i64: 64, 64>}, {transform_indices = @transform_2, window_bounds = array<i64: 1, 32, 128>}, {transform_indices = @transform_3, window_bounds = array<i64: 1, 64, 128>}, {transform_indices = @transform_4, window_bounds = array<i64: 1, 32, 128>}, {transform_indices = @transform_5, window_bounds = array<i64: 1, 1, 128>}, {transform_indices = @transform_6, window_bounds = array<i64: 1, 8, 32>}, {transform_indices = @transform_7, window_bounds = array<i64: 1, 8, 32>}, {transform_indices = @transform_8, window_bounds = array<i64: 1, 64, 32>}, {transform_indices = @transform_9, window_bounds = array<i64: 1, 8, 32>}, {transform_indices = @transform_10, window_bounds = array<i64: 1, 8, 32>}]} {
    %c0_i32 = arith.constant 0 : i32
    %0 = arith.cmpi eq, %arg1, %c0_i32 : i32
    %1 = arith.extui %0 : i1 to i32
    %c0_i32_0 = arith.constant 0 : i32
    %2 = arith.cmpi ne, %1, %c0_i32_0 : i32
    scf.if %2 {
      %c0_112 = arith.constant 0 : index
      %c0_113 = arith.constant 0 : index
      %c0_114 = arith.constant 0 : index
      %357 = vector.load %arg8[%c0_112, %c0_113, %c0_114] : memref<1x8x32xf32, #tpu.memory_space<vmem>>, vector<1x8x32xf32>
      %358 = vector.shape_cast %357 : vector<1x8x32xf32> to vector<8x32xf32>
      %c0_115 = arith.constant 0 : index
      %c0_116 = arith.constant 0 : index
      %c0_117 = arith.constant 0 : index
      %359 = vector.load %arg11[%c0_115, %c0_116, %c0_117] : memref<1x8x32xf32, #tpu.memory_space<vmem>>, vector<1x8x32xf32>
      %360 = vector.shape_cast %359 : vector<1x8x32xf32> to vector<8x32xf32>
      %361 = vector.shape_cast %358 : vector<8x32xf32> to vector<1x8x32xf32>
      tpu.vector_store %arg11[%c0_115, %c0_116, %c0_117], %361 {strides = array<i32>} : memref<1x8x32xf32, #tpu.memory_space<vmem>>, vector<1x8x32xf32>,
      %c0_118 = arith.constant 0 : index
      %c0_119 = arith.constant 0 : index
      %c0_120 = arith.constant 0 : index
      %362 = vector.load %arg9[%c0_118, %c0_119, %c0_120] : memref<1x8x32xf32, #tpu.memory_space<vmem>>, vector<1x8x32xf32>
      %363 = vector.shape_cast %362 : vector<1x8x32xf32> to vector<8x32xf32>
      %c0_121 = arith.constant 0 : index
      %c0_122 = arith.constant 0 : index
      %c0_123 = arith.constant 0 : index
      %364 = vector.load %arg12[%c0_121, %c0_122, %c0_123] : memref<1x8x32xf32, #tpu.memory_space<vmem>>, vector<1x8x32xf32>
      %365 = vector.shape_cast %364 : vector<1x8x32xf32> to vector<8x32xf32>
      %366 = vector.shape_cast %363 : vector<8x32xf32> to vector<1x8x32xf32>
      tpu.vector_store %arg12[%c0_121, %c0_122, %c0_123], %366 {strides = array<i32>} : memref<1x8x32xf32, #tpu.memory_space<vmem>>, vector<1x8x32xf32>,
    } else {
    }
    %c0 = arith.constant 0 : index
    %c0_1 = arith.constant 0 : index
    %3 = vector.load %arg2[%c0, %c0_1] : memref<64x32xbf16, #tpu.memory_space<vmem>>, vector<64x32xbf16>
    %c0_2 = arith.constant 0 : index
    %c0_3 = arith.constant 0 : index
    %c0_4 = arith.constant 0 : index
    %4 = vector.load %arg4[%c0_2, %c0_3, %c0_4] : memref<1x32x128xbf16, #tpu.memory_space<vmem>>, vector<1x32x128xbf16>
    %5 = vector.shape_cast %4 : vector<1x32x128xbf16> to vector<32x128xbf16>
    %cst = arith.constant dense<0.000000e+00> : vector<64x128xf32>
    %6 = tpu.matmul %3, %5, %cst {dimension_numbers = #tpu.dot_dimension_numbers<[1], [0], [0], [1], [0, 0, 1, 1], [], []>} : vector<64x32xbf16>, vector<32x128xbf16>, vector<64x128xf32> -> vector<64x128xf32>
    %c0_5 = arith.constant 0 : index
    %c0_6 = arith.constant 0 : index
    %7 = vector.load %arg3[%c0_5, %c0_6] : memref<64x64xbf16, #tpu.memory_space<vmem>>, vector<64x64xbf16>
    %c0_7 = arith.constant 0 : index
    %c0_8 = arith.constant 0 : index
    %c0_9 = arith.constant 0 : index
    %8 = vector.load %arg5[%c0_7, %c0_8, %c0_9] : memref<1x64x128xbf16, #tpu.memory_space<vmem>>, vector<1x64x128xbf16>
    %9 = vector.shape_cast %8 : vector<1x64x128xbf16> to vector<64x128xbf16>
    %cst_10 = arith.constant dense<0.000000e+00> : vector<64x128xf32>
    %10 = tpu.matmul %7, %9, %cst_10 {dimension_numbers = #tpu.dot_dimension_numbers<[1], [0], [0], [1], [0, 0, 1, 1], [], []>} : vector<64x64xbf16>, vector<64x128xbf16>, vector<64x128xf32> -> vector<64x128xf32>
    %11 = arith.addf %6, %10 : vector<64x128xf32>
    %c0_11 = arith.constant 0 : index
    %c0_12 = arith.constant 0 : index
    %c0_13 = arith.constant 0 : index
    %12 = vector.load %arg7[%c0_11, %c0_12, %c0_13] : memref<1x1x128xf32, #tpu.memory_space<vmem>>, vector<1x1x128xf32>
    %13 = vector.shape_cast %12 : vector<1x1x128xf32> to vector<1x128xf32>
    %14 = vector.broadcast %13 : vector<1x128xf32> to vector<64x128xf32>
    %15 = arith.addf %11, %14 : vector<64x128xf32>
    %c0_14 = arith.constant 0 : index
    %c0_15 = arith.constant 0 : index
    %16 = vector.load %arg13[%c0_14, %c0_15] : memref<64x128xf32, #tpu.memory_space<vmem>>, vector<64x128xf32>
    tpu.vector_store %arg13[%c0_14, %c0_15], %15 {strides = array<i32>} : memref<64x128xf32, #tpu.memory_space<vmem>>, vector<64x128xf32>,
    %c0_16 = arith.constant 0 : index
    %c0_17 = arith.constant 0 : index
    %c0_18 = arith.constant 0 : index
    %17 = vector.load %arg6[%c0_16, %c0_17, %c0_18] : memref<1x32x128xbf16, #tpu.memory_space<vmem>>, vector<1x32x128xbf16>
    %18 = vector.shape_cast %17 : vector<1x32x128xbf16> to vector<32x128xbf16>
    %c0_19 = arith.constant 0 : index
    %c0_20 = arith.constant 0 : index
    %c0_21 = arith.constant 0 : index
    %19 = vector.load %arg11[%c0_19, %c0_20, %c0_21] : memref<1x8x32xf32, #tpu.memory_space<vmem>>, vector<1x8x32xf32>
    %20 = vector.shape_cast %19 : vector<1x8x32xf32> to vector<8x32xf32>
    %c0_22 = arith.constant 0 : index
    %c0_23 = arith.constant 0 : index
    %c0_24 = arith.constant 0 : index
    %21 = vector.load %arg12[%c0_22, %c0_23, %c0_24] : memref<1x8x32xf32, #tpu.memory_space<vmem>>, vector<1x8x32xf32>
    %22 = vector.shape_cast %21 : vector<1x8x32xf32> to vector<8x32xf32>
    %c0_i32_25 = arith.constant 0 : i32
    %c1_i32 = arith.constant 1 : i32
    %23 = arith.subi %c1_i32, %arg0 : i32
    %24 = arith.muli %23, %c0_i32_25 : i32
    %c7_i32 = arith.constant 7 : i32
    %25 = arith.subi %c7_i32, %c0_i32_25 : i32
    %26 = arith.muli %arg0, %25 : i32
    %27 = arith.addi %24, %26 : i32
    %c8_i32 = arith.constant 8 : i32
    %28 = arith.muli %27, %c8_i32 : i32
    %29 = tpu.assume_multiple %28, 8 : i32
    %30 = arith.index_cast %29 : i32 to index
    %c0_26 = arith.constant 0 : index
    %31 = vector.load %arg13[%30, %c0_26] : memref<64x128xf32, #tpu.memory_space<vmem>>, vector<8x128xf32>
    %32 = arith.truncf %20 : vector<8x32xf32> to vector<8x32xbf16>
    %cst_27 = arith.constant dense<0.000000e+00> : vector<8x128xf32>
    %33 = tpu.matmul %32, %18, %cst_27 {dimension_numbers = #tpu.dot_dimension_numbers<[1], [0], [0], [1], [0, 0, 1, 1], [], []>} : vector<8x32xbf16>, vector<32x128xbf16>, vector<8x128xf32> -> vector<8x128xf32>
    %34 = arith.addf %31, %33 : vector<8x128xf32>
    %35 = vector.extract_strided_slice %34 {offsets = [0, 0], sizes = [8, 32], strides = [1, 1]} : vector<8x128xf32> to vector<8x32xf32>
    %36 = arith.negf %35 : vector<8x32xf32>
    %37 = math.exp %36 : vector<8x32xf32>
    %cst_28 = arith.constant 1.000000e+00 : f32
    %38 = vector.broadcast %cst_28 : f32 to vector<8x32xf32>
    %39 = arith.addf %38, %37 : vector<8x32xf32>
    %40 = arith.divf %38, %39 : vector<8x32xf32>
    %41 = vector.extract_strided_slice %34 {offsets = [0, 32], sizes = [8, 32], strides = [1, 1]} : vector<8x128xf32> to vector<8x32xf32>
    %42 = arith.negf %41 : vector<8x32xf32>
    %43 = math.exp %42 : vector<8x32xf32>
    %cst_29 = arith.constant 1.000000e+00 : f32
    %44 = vector.broadcast %cst_29 : f32 to vector<8x32xf32>
    %45 = arith.addf %44, %43 : vector<8x32xf32>
    %46 = arith.divf %44, %45 : vector<8x32xf32>
    %47 = vector.extract_strided_slice %34 {offsets = [0, 64], sizes = [8, 32], strides = [1, 1]} : vector<8x128xf32> to vector<8x32xf32>
    %48 = math.tanh %47 : vector<8x32xf32>
    %49 = vector.extract_strided_slice %34 {offsets = [0, 96], sizes = [8, 32], strides = [1, 1]} : vector<8x128xf32> to vector<8x32xf32>
    %50 = arith.negf %49 : vector<8x32xf32>
    %51 = math.exp %50 : vector<8x32xf32>
    %cst_30 = arith.constant 1.000000e+00 : f32
    %52 = vector.broadcast %cst_30 : f32 to vector<8x32xf32>
    %53 = arith.addf %52, %51 : vector<8x32xf32>
    %54 = arith.divf %52, %53 : vector<8x32xf32>
    %55 = arith.mulf %46, %22 : vector<8x32xf32>
    %56 = arith.mulf %40, %48 : vector<8x32xf32>
    %57 = arith.addf %55, %56 : vector<8x32xf32>
    %58 = math.tanh %57 : vector<8x32xf32>
    %59 = arith.mulf %54, %58 : vector<8x32xf32>
    %c0_31 = arith.constant 0 : index
    %60 = arith.index_cast %29 : i32 to index
    %c0_32 = arith.constant 0 : index
    %61 = vector.load %arg10[%c0_31, %60, %c0_32] : memref<1x64x32xf32, #tpu.memory_space<vmem>>, vector<1x8x32xf32>
    %62 = vector.shape_cast %61 : vector<1x8x32xf32> to vector<8x32xf32>
    %63 = vector.shape_cast %59 : vector<8x32xf32> to vector<1x8x32xf32>
    tpu.vector_store %arg10[%c0_31, %60, %c0_32], %63 {strides = array<i32>} : memref<1x64x32xf32, #tpu.memory_space<vmem>>, vector<1x8x32xf32>,
    %c1_i32_33 = arith.constant 1 : i32
    %c1_i32_34 = arith.constant 1 : i32
    %64 = arith.subi %c1_i32_34, %arg0 : i32
    %65 = arith.muli %64, %c1_i32_33 : i32
    %c7_i32_35 = arith.constant 7 : i32
    %66 = arith.subi %c7_i32_35, %c1_i32_33 : i32
    %67 = arith.muli %arg0, %66 : i32
    %68 = arith.addi %65, %67 : i32
    %c8_i32_36 = arith.constant 8 : i32
    %69 = arith.muli %68, %c8_i32_36 : i32
    %70 = tpu.assume_multiple %69, 8 : i32
    %71 = arith.index_cast %70 : i32 to index
    %c0_37 = arith.constant 0 : index
    %72 = vector.load %arg13[%71, %c0_37] : memref<64x128xf32, #tpu.memory_space<vmem>>, vector<8x128xf32>
    %73 = arith.truncf %59 : vector<8x32xf32> to vector<8x32xbf16>
    %cst_38 = arith.constant dense<0.000000e+00> : vector<8x128xf32>
    %74 = tpu.matmul %73, %18, %cst_38 {dimension_numbers = #tpu.dot_dimension_numbers<[1], [0], [0], [1], [0, 0, 1, 1], [], []>} : vector<8x32xbf16>, vector<32x128xbf16>, vector<8x128xf32> -> vector<8x128xf32>
    %75 = arith.addf %72, %74 : vector<8x128xf32>
    %76 = vector.extract_strided_slice %75 {offsets = [0, 0], sizes = [8, 32], strides = [1, 1]} : vector<8x128xf32> to vector<8x32xf32>
    %77 = arith.negf %76 : vector<8x32xf32>
    %78 = math.exp %77 : vector<8x32xf32>
    %cst_39 = arith.constant 1.000000e+00 : f32
    %79 = vector.broadcast %cst_39 : f32 to vector<8x32xf32>
    %80 = arith.addf %79, %78 : vector<8x32xf32>
    %81 = arith.divf %79, %80 : vector<8x32xf32>
    %82 = vector.extract_strided_slice %75 {offsets = [0, 32], sizes = [8, 32], strides = [1, 1]} : vector<8x128xf32> to vector<8x32xf32>
    %83 = arith.negf %82 : vector<8x32xf32>
    %84 = math.exp %83 : vector<8x32xf32>
    %cst_40 = arith.constant 1.000000e+00 : f32
    %85 = vector.broadcast %cst_40 : f32 to vector<8x32xf32>
    %86 = arith.addf %85, %84 : vector<8x32xf32>
    %87 = arith.divf %85, %86 : vector<8x32xf32>
    %88 = vector.extract_strided_slice %75 {offsets = [0, 64], sizes = [8, 32], strides = [1, 1]} : vector<8x128xf32> to vector<8x32xf32>
    %89 = math.tanh %88 : vector<8x32xf32>
    %90 = vector.extract_strided_slice %75 {offsets = [0, 96], sizes = [8, 32], strides = [1, 1]} : vector<8x128xf32> to vector<8x32xf32>
    %91 = arith.negf %90 : vector<8x32xf32>
    %92 = math.exp %91 : vector<8x32xf32>
    %cst_41 = arith.constant 1.000000e+00 : f32
    %93 = vector.broadcast %cst_41 : f32 to vector<8x32xf32>
    %94 = arith.addf %93, %92 : vector<8x32xf32>
    %95 = arith.divf %93, %94 : vector<8x32xf32>
    %96 = arith.mulf %87, %57 : vector<8x32xf32>
    %97 = arith.mulf %81, %89 : vector<8x32xf32>
    %98 = arith.addf %96, %97 : vector<8x32xf32>
    %99 = math.tanh %98 : vector<8x32xf32>
    %100 = arith.mulf %95, %99 : vector<8x32xf32>
    %c0_42 = arith.constant 0 : index
    %101 = arith.index_cast %70 : i32 to index
    %c0_43 = arith.constant 0 : index
    %102 = vector.load %arg10[%c0_42, %101, %c0_43] : memref<1x64x32xf32, #tpu.memory_space<vmem>>, vector<1x8x32xf32>
    %103 = vector.shape_cast %102 : vector<1x8x32xf32> to vector<8x32xf32>
    %104 = vector.shape_cast %100 : vector<8x32xf32> to vector<1x8x32xf32>
    tpu.vector_store %arg10[%c0_42, %101, %c0_43], %104 {strides = array<i32>} : memref<1x64x32xf32, #tpu.memory_space<vmem>>, vector<1x8x32xf32>,
    %c2_i32 = arith.constant 2 : i32
    %c1_i32_44 = arith.constant 1 : i32
    %105 = arith.subi %c1_i32_44, %arg0 : i32
    %106 = arith.muli %105, %c2_i32 : i32
    %c7_i32_45 = arith.constant 7 : i32
    %107 = arith.subi %c7_i32_45, %c2_i32 : i32
    %108 = arith.muli %arg0, %107 : i32
    %109 = arith.addi %106, %108 : i32
    %c8_i32_46 = arith.constant 8 : i32
    %110 = arith.muli %109, %c8_i32_46 : i32
    %111 = tpu.assume_multiple %110, 8 : i32
    %112 = arith.index_cast %111 : i32 to index
    %c0_47 = arith.constant 0 : index
    %113 = vector.load %arg13[%112, %c0_47] : memref<64x128xf32, #tpu.memory_space<vmem>>, vector<8x128xf32>
    %114 = arith.truncf %100 : vector<8x32xf32> to vector<8x32xbf16>
    %cst_48 = arith.constant dense<0.000000e+00> : vector<8x128xf32>
    %115 = tpu.matmul %114, %18, %cst_48 {dimension_numbers = #tpu.dot_dimension_numbers<[1], [0], [0], [1], [0, 0, 1, 1], [], []>} : vector<8x32xbf16>, vector<32x128xbf16>, vector<8x128xf32> -> vector<8x128xf32>
    %116 = arith.addf %113, %115 : vector<8x128xf32>
    %117 = vector.extract_strided_slice %116 {offsets = [0, 0], sizes = [8, 32], strides = [1, 1]} : vector<8x128xf32> to vector<8x32xf32>
    %118 = arith.negf %117 : vector<8x32xf32>
    %119 = math.exp %118 : vector<8x32xf32>
    %cst_49 = arith.constant 1.000000e+00 : f32
    %120 = vector.broadcast %cst_49 : f32 to vector<8x32xf32>
    %121 = arith.addf %120, %119 : vector<8x32xf32>
    %122 = arith.divf %120, %121 : vector<8x32xf32>
    %123 = vector.extract_strided_slice %116 {offsets = [0, 32], sizes = [8, 32], strides = [1, 1]} : vector<8x128xf32> to vector<8x32xf32>
    %124 = arith.negf %123 : vector<8x32xf32>
    %125 = math.exp %124 : vector<8x32xf32>
    %cst_50 = arith.constant 1.000000e+00 : f32
    %126 = vector.broadcast %cst_50 : f32 to vector<8x32xf32>
    %127 = arith.addf %126, %125 : vector<8x32xf32>
    %128 = arith.divf %126, %127 : vector<8x32xf32>
    %129 = vector.extract_strided_slice %116 {offsets = [0, 64], sizes = [8, 32], strides = [1, 1]} : vector<8x128xf32> to vector<8x32xf32>
    %130 = math.tanh %129 : vector<8x32xf32>
    %131 = vector.extract_strided_slice %116 {offsets = [0, 96], sizes = [8, 32], strides = [1, 1]} : vector<8x128xf32> to vector<8x32xf32>
    %132 = arith.negf %131 : vector<8x32xf32>
    %133 = math.exp %132 : vector<8x32xf32>
    %cst_51 = arith.constant 1.000000e+00 : f32
    %134 = vector.broadcast %cst_51 : f32 to vector<8x32xf32>
    %135 = arith.addf %134, %133 : vector<8x32xf32>
    %136 = arith.divf %134, %135 : vector<8x32xf32>
    %137 = arith.mulf %128, %98 : vector<8x32xf32>
    %138 = arith.mulf %122, %130 : vector<8x32xf32>
    %139 = arith.addf %137, %138 : vector<8x32xf32>
    %140 = math.tanh %139 : vector<8x32xf32>
    %141 = arith.mulf %136, %140 : vector<8x32xf32>
    %c0_52 = arith.constant 0 : index
    %142 = arith.index_cast %111 : i32 to index
    %c0_53 = arith.constant 0 : index
    %143 = vector.load %arg10[%c0_52, %142, %c0_53] : memref<1x64x32xf32, #tpu.memory_space<vmem>>, vector<1x8x32xf32>
    %144 = vector.shape_cast %143 : vector<1x8x32xf32> to vector<8x32xf32>
    %145 = vector.shape_cast %141 : vector<8x32xf32> to vector<1x8x32xf32>
    tpu.vector_store %arg10[%c0_52, %142, %c0_53], %145 {strides = array<i32>} : memref<1x64x32xf32, #tpu.memory_space<vmem>>, vector<1x8x32xf32>,
    %c3_i32 = arith.constant 3 : i32
    %c1_i32_54 = arith.constant 1 : i32
    %146 = arith.subi %c1_i32_54, %arg0 : i32
    %147 = arith.muli %146, %c3_i32 : i32
    %c7_i32_55 = arith.constant 7 : i32
    %148 = arith.subi %c7_i32_55, %c3_i32 : i32
    %149 = arith.muli %arg0, %148 : i32
    %150 = arith.addi %147, %149 : i32
    %c8_i32_56 = arith.constant 8 : i32
    %151 = arith.muli %150, %c8_i32_56 : i32
    %152 = tpu.assume_multiple %151, 8 : i32
    %153 = arith.index_cast %152 : i32 to index
    %c0_57 = arith.constant 0 : index
    %154 = vector.load %arg13[%153, %c0_57] : memref<64x128xf32, #tpu.memory_space<vmem>>, vector<8x128xf32>
    %155 = arith.truncf %141 : vector<8x32xf32> to vector<8x32xbf16>
    %cst_58 = arith.constant dense<0.000000e+00> : vector<8x128xf32>
    %156 = tpu.matmul %155, %18, %cst_58 {dimension_numbers = #tpu.dot_dimension_numbers<[1], [0], [0], [1], [0, 0, 1, 1], [], []>} : vector<8x32xbf16>, vector<32x128xbf16>, vector<8x128xf32> -> vector<8x128xf32>
    %157 = arith.addf %154, %156 : vector<8x128xf32>
    %158 = vector.extract_strided_slice %157 {offsets = [0, 0], sizes = [8, 32], strides = [1, 1]} : vector<8x128xf32> to vector<8x32xf32>
    %159 = arith.negf %158 : vector<8x32xf32>
    %160 = math.exp %159 : vector<8x32xf32>
    %cst_59 = arith.constant 1.000000e+00 : f32
    %161 = vector.broadcast %cst_59 : f32 to vector<8x32xf32>
    %162 = arith.addf %161, %160 : vector<8x32xf32>
    %163 = arith.divf %161, %162 : vector<8x32xf32>
    %164 = vector.extract_strided_slice %157 {offsets = [0, 32], sizes = [8, 32], strides = [1, 1]} : vector<8x128xf32> to vector<8x32xf32>
    %165 = arith.negf %164 : vector<8x32xf32>
    %166 = math.exp %165 : vector<8x32xf32>
    %cst_60 = arith.constant 1.000000e+00 : f32
    %167 = vector.broadcast %cst_60 : f32 to vector<8x32xf32>
    %168 = arith.addf %167, %166 : vector<8x32xf32>
    %169 = arith.divf %167, %168 : vector<8x32xf32>
    %170 = vector.extract_strided_slice %157 {offsets = [0, 64], sizes = [8, 32], strides = [1, 1]} : vector<8x128xf32> to vector<8x32xf32>
    %171 = math.tanh %170 : vector<8x32xf32>
    %172 = vector.extract_strided_slice %157 {offsets = [0, 96], sizes = [8, 32], strides = [1, 1]} : vector<8x128xf32> to vector<8x32xf32>
    %173 = arith.negf %172 : vector<8x32xf32>
    %174 = math.exp %173 : vector<8x32xf32>
    %cst_61 = arith.constant 1.000000e+00 : f32
    %175 = vector.broadcast %cst_61 : f32 to vector<8x32xf32>
    %176 = arith.addf %175, %174 : vector<8x32xf32>
    %177 = arith.divf %175, %176 : vector<8x32xf32>
    %178 = arith.mulf %169, %139 : vector<8x32xf32>
    %179 = arith.mulf %163, %171 : vector<8x32xf32>
    %180 = arith.addf %178, %179 : vector<8x32xf32>
    %181 = math.tanh %180 : vector<8x32xf32>
    %182 = arith.mulf %177, %181 : vector<8x32xf32>
    %c0_62 = arith.constant 0 : index
    %183 = arith.index_cast %152 : i32 to index
    %c0_63 = arith.constant 0 : index
    %184 = vector.load %arg10[%c0_62, %183, %c0_63] : memref<1x64x32xf32, #tpu.memory_space<vmem>>, vector<1x8x32xf32>
    %185 = vector.shape_cast %184 : vector<1x8x32xf32> to vector<8x32xf32>
    %186 = vector.shape_cast %182 : vector<8x32xf32> to vector<1x8x32xf32>
    tpu.vector_store %arg10[%c0_62, %183, %c0_63], %186 {strides = array<i32>} : memref<1x64x32xf32, #tpu.memory_space<vmem>>, vector<1x8x32xf32>,
    %c4_i32 = arith.constant 4 : i32
    %c1_i32_64 = arith.constant 1 : i32
    %187 = arith.subi %c1_i32_64, %arg0 : i32
    %188 = arith.muli %187, %c4_i32 : i32
    %c7_i32_65 = arith.constant 7 : i32
    %189 = arith.subi %c7_i32_65, %c4_i32 : i32
    %190 = arith.muli %arg0, %189 : i32
    %191 = arith.addi %188, %190 : i32
    %c8_i32_66 = arith.constant 8 : i32
    %192 = arith.muli %191, %c8_i32_66 : i32
    %193 = tpu.assume_multiple %192, 8 : i32
    %194 = arith.index_cast %193 : i32 to index
    %c0_67 = arith.constant 0 : index
    %195 = vector.load %arg13[%194, %c0_67] : memref<64x128xf32, #tpu.memory_space<vmem>>, vector<8x128xf32>
    %196 = arith.truncf %182 : vector<8x32xf32> to vector<8x32xbf16>
    %cst_68 = arith.constant dense<0.000000e+00> : vector<8x128xf32>
    %197 = tpu.matmul %196, %18, %cst_68 {dimension_numbers = #tpu.dot_dimension_numbers<[1], [0], [0], [1], [0, 0, 1, 1], [], []>} : vector<8x32xbf16>, vector<32x128xbf16>, vector<8x128xf32> -> vector<8x128xf32>
    %198 = arith.addf %195, %197 : vector<8x128xf32>
    %199 = vector.extract_strided_slice %198 {offsets = [0, 0], sizes = [8, 32], strides = [1, 1]} : vector<8x128xf32> to vector<8x32xf32>
    %200 = arith.negf %199 : vector<8x32xf32>
    %201 = math.exp %200 : vector<8x32xf32>
    %cst_69 = arith.constant 1.000000e+00 : f32
    %202 = vector.broadcast %cst_69 : f32 to vector<8x32xf32>
    %203 = arith.addf %202, %201 : vector<8x32xf32>
    %204 = arith.divf %202, %203 : vector<8x32xf32>
    %205 = vector.extract_strided_slice %198 {offsets = [0, 32], sizes = [8, 32], strides = [1, 1]} : vector<8x128xf32> to vector<8x32xf32>
    %206 = arith.negf %205 : vector<8x32xf32>
    %207 = math.exp %206 : vector<8x32xf32>
    %cst_70 = arith.constant 1.000000e+00 : f32
    %208 = vector.broadcast %cst_70 : f32 to vector<8x32xf32>
    %209 = arith.addf %208, %207 : vector<8x32xf32>
    %210 = arith.divf %208, %209 : vector<8x32xf32>
    %211 = vector.extract_strided_slice %198 {offsets = [0, 64], sizes = [8, 32], strides = [1, 1]} : vector<8x128xf32> to vector<8x32xf32>
    %212 = math.tanh %211 : vector<8x32xf32>
    %213 = vector.extract_strided_slice %198 {offsets = [0, 96], sizes = [8, 32], strides = [1, 1]} : vector<8x128xf32> to vector<8x32xf32>
    %214 = arith.negf %213 : vector<8x32xf32>
    %215 = math.exp %214 : vector<8x32xf32>
    %cst_71 = arith.constant 1.000000e+00 : f32
    %216 = vector.broadcast %cst_71 : f32 to vector<8x32xf32>
    %217 = arith.addf %216, %215 : vector<8x32xf32>
    %218 = arith.divf %216, %217 : vector<8x32xf32>
    %219 = arith.mulf %210, %180 : vector<8x32xf32>
    %220 = arith.mulf %204, %212 : vector<8x32xf32>
    %221 = arith.addf %219, %220 : vector<8x32xf32>
    %222 = math.tanh %221 : vector<8x32xf32>
    %223 = arith.mulf %218, %222 : vector<8x32xf32>
    %c0_72 = arith.constant 0 : index
    %224 = arith.index_cast %193 : i32 to index
    %c0_73 = arith.constant 0 : index
    %225 = vector.load %arg10[%c0_72, %224, %c0_73] : memref<1x64x32xf32, #tpu.memory_space<vmem>>, vector<1x8x32xf32>
    %226 = vector.shape_cast %225 : vector<1x8x32xf32> to vector<8x32xf32>
    %227 = vector.shape_cast %223 : vector<8x32xf32> to vector<1x8x32xf32>
    tpu.vector_store %arg10[%c0_72, %224, %c0_73], %227 {strides = array<i32>} : memref<1x64x32xf32, #tpu.memory_space<vmem>>, vector<1x8x32xf32>,
    %c5_i32 = arith.constant 5 : i32
    %c1_i32_74 = arith.constant 1 : i32
    %228 = arith.subi %c1_i32_74, %arg0 : i32
    %229 = arith.muli %228, %c5_i32 : i32
    %c7_i32_75 = arith.constant 7 : i32
    %230 = arith.subi %c7_i32_75, %c5_i32 : i32
    %231 = arith.muli %arg0, %230 : i32
    %232 = arith.addi %229, %231 : i32
    %c8_i32_76 = arith.constant 8 : i32
    %233 = arith.muli %232, %c8_i32_76 : i32
    %234 = tpu.assume_multiple %233, 8 : i32
    %235 = arith.index_cast %234 : i32 to index
    %c0_77 = arith.constant 0 : index
    %236 = vector.load %arg13[%235, %c0_77] : memref<64x128xf32, #tpu.memory_space<vmem>>, vector<8x128xf32>
    %237 = arith.truncf %223 : vector<8x32xf32> to vector<8x32xbf16>
    %cst_78 = arith.constant dense<0.000000e+00> : vector<8x128xf32>
    %238 = tpu.matmul %237, %18, %cst_78 {dimension_numbers = #tpu.dot_dimension_numbers<[1], [0], [0], [1], [0, 0, 1, 1], [], []>} : vector<8x32xbf16>, vector<32x128xbf16>, vector<8x128xf32> -> vector<8x128xf32>
    %239 = arith.addf %236, %238 : vector<8x128xf32>
    %240 = vector.extract_strided_slice %239 {offsets = [0, 0], sizes = [8, 32], strides = [1, 1]} : vector<8x128xf32> to vector<8x32xf32>
    %241 = arith.negf %240 : vector<8x32xf32>
    %242 = math.exp %241 : vector<8x32xf32>
    %cst_79 = arith.constant 1.000000e+00 : f32
    %243 = vector.broadcast %cst_79 : f32 to vector<8x32xf32>
    %244 = arith.addf %243, %242 : vector<8x32xf32>
    %245 = arith.divf %243, %244 : vector<8x32xf32>
    %246 = vector.extract_strided_slice %239 {offsets = [0, 32], sizes = [8, 32], strides = [1, 1]} : vector<8x128xf32> to vector<8x32xf32>
    %247 = arith.negf %246 : vector<8x32xf32>
    %248 = math.exp %247 : vector<8x32xf32>
    %cst_80 = arith.constant 1.000000e+00 : f32
    %249 = vector.broadcast %cst_80 : f32 to vector<8x32xf32>
    %250 = arith.addf %249, %248 : vector<8x32xf32>
    %251 = arith.divf %249, %250 : vector<8x32xf32>
    %252 = vector.extract_strided_slice %239 {offsets = [0, 64], sizes = [8, 32], strides = [1, 1]} : vector<8x128xf32> to vector<8x32xf32>
    %253 = math.tanh %252 : vector<8x32xf32>
    %254 = vector.extract_strided_slice %239 {offsets = [0, 96], sizes = [8, 32], strides = [1, 1]} : vector<8x128xf32> to vector<8x32xf32>
    %255 = arith.negf %254 : vector<8x32xf32>
    %256 = math.exp %255 : vector<8x32xf32>
    %cst_81 = arith.constant 1.000000e+00 : f32
    %257 = vector.broadcast %cst_81 : f32 to vector<8x32xf32>
    %258 = arith.addf %257, %256 : vector<8x32xf32>
    %259 = arith.divf %257, %258 : vector<8x32xf32>
    %260 = arith.mulf %251, %221 : vector<8x32xf32>
    %261 = arith.mulf %245, %253 : vector<8x32xf32>
    %262 = arith.addf %260, %261 : vector<8x32xf32>
    %263 = math.tanh %262 : vector<8x32xf32>
    %264 = arith.mulf %259, %263 : vector<8x32xf32>
    %c0_82 = arith.constant 0 : index
    %265 = arith.index_cast %234 : i32 to index
    %c0_83 = arith.constant 0 : index
    %266 = vector.load %arg10[%c0_82, %265, %c0_83] : memref<1x64x32xf32, #tpu.memory_space<vmem>>, vector<1x8x32xf32>
    %267 = vector.shape_cast %266 : vector<1x8x32xf32> to vector<8x32xf32>
    %268 = vector.shape_cast %264 : vector<8x32xf32> to vector<1x8x32xf32>
    tpu.vector_store %arg10[%c0_82, %265, %c0_83], %268 {strides = array<i32>} : memref<1x64x32xf32, #tpu.memory_space<vmem>>, vector<1x8x32xf32>,
    %c6_i32 = arith.constant 6 : i32
    %c1_i32_84 = arith.constant 1 : i32
    %269 = arith.subi %c1_i32_84, %arg0 : i32
    %270 = arith.muli %269, %c6_i32 : i32
    %c7_i32_85 = arith.constant 7 : i32
    %271 = arith.subi %c7_i32_85, %c6_i32 : i32
    %272 = arith.muli %arg0, %271 : i32
    %273 = arith.addi %270, %272 : i32
    %c8_i32_86 = arith.constant 8 : i32
    %274 = arith.muli %273, %c8_i32_86 : i32
    %275 = tpu.assume_multiple %274, 8 : i32
    %276 = arith.index_cast %275 : i32 to index
    %c0_87 = arith.constant 0 : index
    %277 = vector.load %arg13[%276, %c0_87] : memref<64x128xf32, #tpu.memory_space<vmem>>, vector<8x128xf32>
    %278 = arith.truncf %264 : vector<8x32xf32> to vector<8x32xbf16>
    %cst_88 = arith.constant dense<0.000000e+00> : vector<8x128xf32>
    %279 = tpu.matmul %278, %18, %cst_88 {dimension_numbers = #tpu.dot_dimension_numbers<[1], [0], [0], [1], [0, 0, 1, 1], [], []>} : vector<8x32xbf16>, vector<32x128xbf16>, vector<8x128xf32> -> vector<8x128xf32>
    %280 = arith.addf %277, %279 : vector<8x128xf32>
    %281 = vector.extract_strided_slice %280 {offsets = [0, 0], sizes = [8, 32], strides = [1, 1]} : vector<8x128xf32> to vector<8x32xf32>
    %282 = arith.negf %281 : vector<8x32xf32>
    %283 = math.exp %282 : vector<8x32xf32>
    %cst_89 = arith.constant 1.000000e+00 : f32
    %284 = vector.broadcast %cst_89 : f32 to vector<8x32xf32>
    %285 = arith.addf %284, %283 : vector<8x32xf32>
    %286 = arith.divf %284, %285 : vector<8x32xf32>
    %287 = vector.extract_strided_slice %280 {offsets = [0, 32], sizes = [8, 32], strides = [1, 1]} : vector<8x128xf32> to vector<8x32xf32>
    %288 = arith.negf %287 : vector<8x32xf32>
    %289 = math.exp %288 : vector<8x32xf32>
    %cst_90 = arith.constant 1.000000e+00 : f32
    %290 = vector.broadcast %cst_90 : f32 to vector<8x32xf32>
    %291 = arith.addf %290, %289 : vector<8x32xf32>
    %292 = arith.divf %290, %291 : vector<8x32xf32>
    %293 = vector.extract_strided_slice %280 {offsets = [0, 64], sizes = [8, 32], strides = [1, 1]} : vector<8x128xf32> to vector<8x32xf32>
    %294 = math.tanh %293 : vector<8x32xf32>
    %295 = vector.extract_strided_slice %280 {offsets = [0, 96], sizes = [8, 32], strides = [1, 1]} : vector<8x128xf32> to vector<8x32xf32>
    %296 = arith.negf %295 : vector<8x32xf32>
    %297 = math.exp %296 : vector<8x32xf32>
    %cst_91 = arith.constant 1.000000e+00 : f32
    %298 = vector.broadcast %cst_91 : f32 to vector<8x32xf32>
    %299 = arith.addf %298, %297 : vector<8x32xf32>
    %300 = arith.divf %298, %299 : vector<8x32xf32>
    %301 = arith.mulf %292, %262 : vector<8x32xf32>
    %302 = arith.mulf %286, %294 : vector<8x32xf32>
    %303 = arith.addf %301, %302 : vector<8x32xf32>
    %304 = math.tanh %303 : vector<8x32xf32>
    %305 = arith.mulf %300, %304 : vector<8x32xf32>
    %c0_92 = arith.constant 0 : index
    %306 = arith.index_cast %275 : i32 to index
    %c0_93 = arith.constant 0 : index
    %307 = vector.load %arg10[%c0_92, %306, %c0_93] : memref<1x64x32xf32, #tpu.memory_space<vmem>>, vector<1x8x32xf32>
    %308 = vector.shape_cast %307 : vector<1x8x32xf32> to vector<8x32xf32>
    %309 = vector.shape_cast %305 : vector<8x32xf32> to vector<1x8x32xf32>
    tpu.vector_store %arg10[%c0_92, %306, %c0_93], %309 {strides = array<i32>} : memref<1x64x32xf32, #tpu.memory_space<vmem>>, vector<1x8x32xf32>,
    %c7_i32_94 = arith.constant 7 : i32
    %c1_i32_95 = arith.constant 1 : i32
    %310 = arith.subi %c1_i32_95, %arg0 : i32
    %311 = arith.muli %310, %c7_i32_94 : i32
    %c7_i32_96 = arith.constant 7 : i32
    %312 = arith.subi %c7_i32_96, %c7_i32_94 : i32
    %313 = arith.muli %arg0, %312 : i32
    %314 = arith.addi %311, %313 : i32
    %c8_i32_97 = arith.constant 8 : i32
    %315 = arith.muli %314, %c8_i32_97 : i32
    %316 = tpu.assume_multiple %315, 8 : i32
    %317 = arith.index_cast %316 : i32 to index
    %c0_98 = arith.constant 0 : index
    %318 = vector.load %arg13[%317, %c0_98] : memref<64x128xf32, #tpu.memory_space<vmem>>, vector<8x128xf32>
    %319 = arith.truncf %305 : vector<8x32xf32> to vector<8x32xbf16>
    %cst_99 = arith.constant dense<0.000000e+00> : vector<8x128xf32>
    %320 = tpu.matmul %319, %18, %cst_99 {dimension_numbers = #tpu.dot_dimension_numbers<[1], [0], [0], [1], [0, 0, 1, 1], [], []>} : vector<8x32xbf16>, vector<32x128xbf16>, vector<8x128xf32> -> vector<8x128xf32>
    %321 = arith.addf %318, %320 : vector<8x128xf32>
    %322 = vector.extract_strided_slice %321 {offsets = [0, 0], sizes = [8, 32], strides = [1, 1]} : vector<8x128xf32> to vector<8x32xf32>
    %323 = arith.negf %322 : vector<8x32xf32>
    %324 = math.exp %323 : vector<8x32xf32>
    %cst_100 = arith.constant 1.000000e+00 : f32
    %325 = vector.broadcast %cst_100 : f32 to vector<8x32xf32>
    %326 = arith.addf %325, %324 : vector<8x32xf32>
    %327 = arith.divf %325, %326 : vector<8x32xf32>
    %328 = vector.extract_strided_slice %321 {offsets = [0, 32], sizes = [8, 32], strides = [1, 1]} : vector<8x128xf32> to vector<8x32xf32>
    %329 = arith.negf %328 : vector<8x32xf32>
    %330 = math.exp %329 : vector<8x32xf32>
    %cst_101 = arith.constant 1.000000e+00 : f32
    %331 = vector.broadcast %cst_101 : f32 to vector<8x32xf32>
    %332 = arith.addf %331, %330 : vector<8x32xf32>
    %333 = arith.divf %331, %332 : vector<8x32xf32>
    %334 = vector.extract_strided_slice %321 {offsets = [0, 64], sizes = [8, 32], strides = [1, 1]} : vector<8x128xf32> to vector<8x32xf32>
    %335 = math.tanh %334 : vector<8x32xf32>
    %336 = vector.extract_strided_slice %321 {offsets = [0, 96], sizes = [8, 32], strides = [1, 1]} : vector<8x128xf32> to vector<8x32xf32>
    %337 = arith.negf %336 : vector<8x32xf32>
    %338 = math.exp %337 : vector<8x32xf32>
    %cst_102 = arith.constant 1.000000e+00 : f32
    %339 = vector.broadcast %cst_102 : f32 to vector<8x32xf32>
    %340 = arith.addf %339, %338 : vector<8x32xf32>
    %341 = arith.divf %339, %340 : vector<8x32xf32>
    %342 = arith.mulf %333, %303 : vector<8x32xf32>
    %343 = arith.mulf %327, %335 : vector<8x32xf32>
    %344 = arith.addf %342, %343 : vector<8x32xf32>
    %345 = math.tanh %344 : vector<8x32xf32>
    %346 = arith.mulf %341, %345 : vector<8x32xf32>
    %c0_103 = arith.constant 0 : index
    %347 = arith.index_cast %316 : i32 to index
    %c0_104 = arith.constant 0 : index
    %348 = vector.load %arg10[%c0_103, %347, %c0_104] : memref<1x64x32xf32, #tpu.memory_space<vmem>>, vector<1x8x32xf32>
    %349 = vector.shape_cast %348 : vector<1x8x32xf32> to vector<8x32xf32>
    %350 = vector.shape_cast %346 : vector<8x32xf32> to vector<1x8x32xf32>
    tpu.vector_store %arg10[%c0_103, %347, %c0_104], %350 {strides = array<i32>} : memref<1x64x32xf32, #tpu.memory_space<vmem>>, vector<1x8x32xf32>,
    %c8_i32_105 = arith.constant 8 : i32
    %c0_106 = arith.constant 0 : index
    %c0_107 = arith.constant 0 : index
    %c0_108 = arith.constant 0 : index
    %351 = vector.load %arg11[%c0_106, %c0_107, %c0_108] : memref<1x8x32xf32, #tpu.memory_space<vmem>>, vector<1x8x32xf32>
    %352 = vector.shape_cast %351 : vector<1x8x32xf32> to vector<8x32xf32>
    %353 = vector.shape_cast %346 : vector<8x32xf32> to vector<1x8x32xf32>
    tpu.vector_store %arg11[%c0_106, %c0_107, %c0_108], %353 {strides = array<i32>} : memref<1x8x32xf32, #tpu.memory_space<vmem>>, vector<1x8x32xf32>,
    %c0_109 = arith.constant 0 : index
    %c0_110 = arith.constant 0 : index
    %c0_111 = arith.constant 0 : index
    %354 = vector.load %arg12[%c0_109, %c0_110, %c0_111] : memref<1x8x32xf32, #tpu.memory_space<vmem>>, vector<1x8x32xf32>
    %355 = vector.shape_cast %354 : vector<1x8x32xf32> to vector<8x32xf32>
    %356 = vector.shape_cast %344 : vector<8x32xf32> to vector<1x8x32xf32>
    tpu.vector_store %arg12[%c0_109, %c0_110, %c0_111], %356 {strides = array<i32>} : memref<1x8x32xf32, #tpu.memory_space<vmem>>, vector<1x8x32xf32>,
    return
  }
  func.func @transform_0(%arg0: i32, %arg1: i32) -> (i32, i32) {
    %c1_i32 = arith.constant 1 : i32
    %0 = arith.subi %c1_i32, %arg0 : i32
    %1 = arith.muli %0, %arg1 : i32
    %c0_i32 = arith.constant 0 : i32
    %2 = arith.subi %c0_i32, %arg1 : i32
    %3 = arith.muli %arg0, %2 : i32
    %4 = arith.addi %1, %3 : i32
    %c0_i32_0 = arith.constant 0 : i32
    %c0_i32_1 = arith.constant 0 : i32
    return %4, %c0_i32_0 : i32, i32
  }
  func.func @transform_1(%arg0: i32, %arg1: i32) -> (i32, i32) {
    %c1_i32 = arith.constant 1 : i32
    %0 = arith.subi %c1_i32, %arg0 : i32
    %1 = arith.muli %0, %arg1 : i32
    %c0_i32 = arith.constant 0 : i32
    %2 = arith.subi %c0_i32, %arg1 : i32
    %3 = arith.muli %arg0, %2 : i32
    %4 = arith.addi %1, %3 : i32
    %c0_i32_0 = arith.constant 0 : i32
    %c0_i32_1 = arith.constant 0 : i32
    return %4, %c0_i32_0 : i32, i32
  }
  func.func @transform_2(%arg0: i32, %arg1: i32) -> (i32, i32, i32) {
    %c0_i32 = arith.constant 0 : i32
    %c0_i32_0 = arith.constant 0 : i32
    %c0_i32_1 = arith.constant 0 : i32
    return %arg0, %c0_i32, %c0_i32_0 : i32, i32, i32
  }
  func.func @transform_3(%arg0: i32, %arg1: i32) -> (i32, i32, i32) {
    %c0_i32 = arith.constant 0 : i32
    %c0_i32_0 = arith.constant 0 : i32
    %c0_i32_1 = arith.constant 0 : i32
    return %arg0, %c0_i32, %c0_i32_0 : i32, i32, i32
  }
  func.func @transform_4(%arg0: i32, %arg1: i32) -> (i32, i32, i32) {
    %c0_i32 = arith.constant 0 : i32
    %c0_i32_0 = arith.constant 0 : i32
    %c0_i32_1 = arith.constant 0 : i32
    return %arg0, %c0_i32, %c0_i32_0 : i32, i32, i32
  }
  func.func @transform_5(%arg0: i32, %arg1: i32) -> (i32, i32, i32) {
    %c0_i32 = arith.constant 0 : i32
    %c0_i32_0 = arith.constant 0 : i32
    %c0_i32_1 = arith.constant 0 : i32
    return %arg0, %c0_i32, %c0_i32_0 : i32, i32, i32
  }
  func.func @transform_6(%arg0: i32, %arg1: i32) -> (i32, i32, i32) {
    %c0_i32 = arith.constant 0 : i32
    %c0_i32_0 = arith.constant 0 : i32
    %c0_i32_1 = arith.constant 0 : i32
    return %arg0, %c0_i32, %c0_i32_0 : i32, i32, i32
  }
  func.func @transform_7(%arg0: i32, %arg1: i32) -> (i32, i32, i32) {
    %c0_i32 = arith.constant 0 : i32
    %c0_i32_0 = arith.constant 0 : i32
    %c0_i32_1 = arith.constant 0 : i32
    return %arg0, %c0_i32, %c0_i32_0 : i32, i32, i32
  }
  func.func @transform_8(%arg0: i32, %arg1: i32) -> (i32, i32, i32) {
    %c1_i32 = arith.constant 1 : i32
    %0 = arith.subi %c1_i32, %arg0 : i32
    %1 = arith.muli %0, %arg1 : i32
    %c0_i32 = arith.constant 0 : i32
    %2 = arith.subi %c0_i32, %arg1 : i32
    %3 = arith.muli %arg0, %2 : i32
    %4 = arith.addi %1, %3 : i32
    %c0_i32_0 = arith.constant 0 : i32
    %c0_i32_1 = arith.constant 0 : i32
    return %arg0, %4, %c0_i32_0 : i32, i32, i32
  }
  func.func @transform_9(%arg0: i32, %arg1: i32) -> (i32, i32, i32) {
    %c0_i32 = arith.constant 0 : i32
    %c0_i32_0 = arith.constant 0 : i32
    %c0_i32_1 = arith.constant 0 : i32
    return %arg0, %c0_i32, %c0_i32_0 : i32, i32, i32
  }
  func.func @transform_10(%arg0: i32, %arg1: i32) -> (i32, i32, i32) {
    %c0_i32 = arith.constant 0 : i32
    %c0_i32_0 = arith.constant 0 : i32
    %c0_i32_1 = arith.constant 0 : i32
    return %arg0, %c0_i32, %c0_i32_0 : i32, i32, i32
  }
}

</mosaic_0001>

<llo_original>
// kernel: nmt_decoder_ba_forward.1
$region0: #{nmt_decoder_ba_forward.1}
  #allocation0 [shape = 'u32[]', space=smem, size = 0x4, offset = 0x4, fixed_abs, tag = 'smem constant byte address 0x4 - core index']
  #allocation1 [shape = 'u32[144,128]{1,0:T(1,128)}', space=vmem, size = 0x12000, scoped, tag = 'internal scratch']
  #allocation2 [shape = 'f32[64,128]{1,0:T(8,128)}', space=vmem, size = 0x8000, scoped, tag = 'scratch operand']
  %s0 = inlined_call_operand.vmem [shape: bf16[64,32], index: 0, kind: input, shape index: {}]
  %s1 = inlined_call_operand.vmem [shape: bf16[64,64], index: 1, kind: input, shape index: {}]
  %s2 = inlined_call_operand.vmem [shape: bf16[2,32,128], index: 2, kind: input, shape index: {}]
  %s3 = inlined_call_operand.vmem [shape: bf16[2,64,128], index: 3, kind: input, shape index: {}]
  %s4 = inlined_call_operand.vmem [shape: bf16[2,32,128], index: 4, kind: input, shape index: {}]
  %s5 = inlined_call_operand.vmem [shape: f32[2,1,128], index: 5, kind: input, shape index: {}]
  %s6 = inlined_call_operand.vmem [shape: f32[2,8,32], index: 6, kind: input, shape index: {}]
  %s7 = inlined_call_operand.vmem [shape: f32[2,8,32], index: 7, kind: input, shape index: {}]
  %s8 = inlined_call_operand.vmem [shape: f32[2,64,32], index: 8, kind: output, shape index: {0}]
  %s9 = inlined_call_operand.vmem [shape: f32[2,8,32], index: 9, kind: output, shape index: {1}]
  %s10 = inlined_call_operand.vmem [shape: f32[2,8,32], index: 10, kind: output, shape index: {2}]
  %11 = xla_tuple %s8, %s9, %s10
  %s12 = sld [smem:[#allocation0]]
  $region85: #{nmt_decoder_ba_forward.1} parent=0
    _
  %s14 = ssub.s32 1, %s12
  %s15 = scalar_select 0, %s14, %s12
  loop: start=0, step=1, limit=4
  $region2: #{nmt_decoder_ba_forward.1} parent=0 // loop_pre_header
    _
  $region3: #{nmt_decoder_ba_forward.1} parent=0 // loop_header
    %s17 = sphi 0, %s21
    %p18 = scmp.ge.s32.totalorder %s17, 4
    %s24 = sphi 0, %s36
    %s25 = sphi 0, %s32
    %s26 = sphi 0, %s24
    %s27 = sphi 0, %s25
    %s28 = sphi 0, %s26
    %s29 = sphi 0, %s27
    %s49 = sphi 0, %s51
    %s52 = sphi 0, %s49
    %s53 = sphi 0, %s52
    %s69 = sphi 0, %s53
    %s85 = sphi 0, %s87
    %s88 = sphi 0, %s85
    %s89 = sphi 0, %s88
    %s105 = sphi 0, %s89
    %s111 = sphi 0, %s113
    %s114 = sphi 0, %s111
    %s115 = sphi 0, %s114
    %s131 = sphi 0, %s115
    %s137 = sphi 0, %s139
    %s140 = sphi 0, %s137
    %s141 = sphi 0, %s140
    %s157 = sphi 0, %s141
    %s163 = sphi 0, %s165
    %s166 = sphi 0, %s163
    %s167 = sphi 0, %s166
    %s183 = sphi 0, %s167
    %s189 = sphi 0, %s191
    %s192 = sphi 0, %s189
    %s193 = sphi 0, %s192
    %s209 = sphi 0, %s193
    %s215 = sphi 0, %s217
    %s218 = sphi 0, %s215
    %s219 = sphi 0, %s218
    %s235 = sphi 0, %s219
    %s241 = sphi 0, %s243
    %s244 = sphi 0, %s241
    %s245 = sphi 0, %s244
    %s261 = sphi 0, %s245
    %s279 = sphi 0, %s281
    %s282 = sphi 0, %s279
    %s283 = sphi 0, %s282
    %s299 = sphi 0, %s283
    %s305 = sphi 0, %s307
    %s308 = sphi 0, %s305
    %s309 = sphi 0, %s308
    %s325 = sphi 0, %s309
    %s331 = sphi 0, %s333
    %s334 = sphi 0, %s331
    %s335 = sphi 0, %s334
    %s351 = sphi 0, %s335
  $region4: #{nmt_decoder_ba_forward.1} parent=0 // loop_header_branch
    %20 = sbr.rel (%p18) target = $region8
  $region5: #{nmt_decoder_ba_forward.1} parent=0 // loop_body
    %s22 = ssub.s32 %s17, 1
    %s23 = ssub.s32 %s17, 2
    %s30 = sadd.s32 1, %s25
    %p31 = scmp.ge.s32.totalorder %s30, 1
    %s32 = scalar_select %p31, 0, %s30
    %s33 = sadd.s32 1, %s24
    %s34 = scalar_select %p31, %s33, %s24
    %p35 = scmp.ge.s32.totalorder %s34, 2
    %s36 = scalar_select %p35, 0, %s34
    %s37 = ssub.s32 1, %s24
    %s38 = smul.u32 %s37, %s25
    %s39 = ssub.s32 0, %s25
    %s40 = smul.u32 %s24, %s39
    %s41 = sadd.s32 %s38, %s40
    %s42 = ssub.s32 1, %s36
    %s43 = smul.u32 %s42, %s32
    %s44 = ssub.s32 0, %s32
    %s45 = smul.u32 %s36, %s44
    %s46 = sadd.s32 %s43, %s45
    %s47 = ssub.s32 %s41, %s46
    %p48 = scmp.eq.s32.totalorder %s47, 0
    %s50 = sadd.s32 %s49, 1
    %s51 = scalar_select %p48, %s49, %s50
    %p54 = pneg %p48
    %p55 = scmp.eq.s32.totalorder %s17, 1
    %p56 = por %p54, %p55
    %p57 = scmp.ne.s32.totalorder %s49, %s52
    %p58 = scmp.eq.s32.totalorder %s17, 0
    %p59 = por %p57, %p58
    %p60 = scmp.ne.s32.totalorder %s49, %s52
    %p61 = scmp.eq.s32.totalorder %s22, 1
    %p62 = por %p60, %p61
    %p63 = scmp.ne.s32.totalorder %s52, %s53
    %p64 = scmp.eq.s32.totalorder %s22, 0
    %p65 = por %p63, %p64
    %p66 = scmp.ne.s32.totalorder %s52, %s53
    %p67 = scmp.eq.s32.totalorder %s23, 1
    %p68 = por %p66, %p67
    %p70 = scmp.ne.s32.totalorder %s53, %s69
    %p71 = scmp.eq.s32.totalorder %s23, 0
    %p72 = por %p70, %p71
    %s73 = ssub.s32 1, %s24
    %s74 = smul.u32 %s73, %s25
    %s75 = ssub.s32 0, %s25
    %s76 = smul.u32 %s24, %s75
    %s77 = sadd.s32 %s74, %s76
    %s78 = ssub.s32 1, %s36
    %s79 = smul.u32 %s78, %s32
    %s80 = ssub.s32 0, %s32
    %s81 = smul.u32 %s36, %s80
    %s82 = sadd.s32 %s79, %s81
    %s83 = ssub.s32 %s77, %s82
    %p84 = scmp.eq.s32.totalorder %s83, 0
    %s86 = sadd.s32 %s85, 1
    %s87 = scalar_select %p84, %s85, %s86
    %p90 = pneg %p84
    %p91 = scmp.eq.s32.totalorder %s17, 1
    %p92 = por %p90, %p91
    %p93 = scmp.ne.s32.totalorder %s85, %s88
    %p94 = scmp.eq.s32.totalorder %s17, 0
    %p95 = por %p93, %p94
    %p96 = scmp.ne.s32.totalorder %s85, %s88
    %p97 = scmp.eq.s32.totalorder %s22, 1
    %p98 = por %p96, %p97
    %p99 = scmp.ne.s32.totalorder %s88, %s89
    %p100 = scmp.eq.s32.totalorder %s22, 0
    %p101 = por %p99, %p100
    %p102 = scmp.ne.s32.totalorder %s88, %s89
    %p103 = scmp.eq.s32.totalorder %s23, 1
    %p104 = por %p102, %p103
    %p106 = scmp.ne.s32.totalorder %s89, %s105
    %p107 = scmp.eq.s32.totalorder %s23, 0
    %p108 = por %p106, %p107
    %s109 = ssub.s32 %s24, %s36
    %p110 = scmp.eq.s32.totalorder %s109, 0
    %s112 = sadd.s32 %s111, 1
    %s113 = scalar_select %p110, %s111, %s112
    %p116 = pneg %p110
    %p117 = scmp.eq.s32.totalorder %s17, 1
    %p118 = por %p116, %p117
    %p119 = scmp.ne.s32.totalorder %s111, %s114
    %p120 = scmp.eq.s32.totalorder %s17, 0
    %p121 = por %p119, %p120
    %p122 = scmp.ne.s32.totalorder %s111, %s114
    %p123 = scmp.eq.s32.totalorder %s22, 1
    %p124 = por %p122, %p123
    %p125 = scmp.ne.s32.totalorder %s114, %s115
    %p126 = scmp.eq.s32.totalorder %s22, 0
    %p127 = por %p125, %p126
    %p128 = scmp.ne.s32.totalorder %s114, %s115
    %p129 = scmp.eq.s32.totalorder %s23, 1
    %p130 = por %p128, %p129
    %p132 = scmp.ne.s32.totalorder %s115, %s131
    %p133 = scmp.eq.s32.totalorder %s23, 0
    %p134 = por %p132, %p133
    %s135 = ssub.s32 %s24, %s36
    %p136 = scmp.eq.s32.totalorder %s135, 0
    %s138 = sadd.s32 %s137, 1
    %s139 = scalar_select %p136, %s137, %s138
    %p142 = pneg %p136
    %p143 = scmp.eq.s32.totalorder %s17, 1
    %p144 = por %p142, %p143
    %p145 = scmp.ne.s32.totalorder %s137, %s140
    %p146 = scmp.eq.s32.totalorder %s17, 0
    %p147 = por %p145, %p146
    %p148 = scmp.ne.s32.totalorder %s137, %s140
    %p149 = scmp.eq.s32.totalorder %s22, 1
    %p150 = por %p148, %p149
    %p151 = scmp.ne.s32.totalorder %s140, %s141
    %p152 = scmp.eq.s32.totalorder %s22, 0
    %p153 = por %p151, %p152
    %p154 = scmp.ne.s32.totalorder %s140, %s141
    %p155 = scmp.eq.s32.totalorder %s23, 1
    %p156 = por %p154, %p155
    %p158 = scmp.ne.s32.totalorder %s141, %s157
    %p159 = scmp.eq.s32.totalorder %s23, 0
    %p160 = por %p158, %p159
    %s161 = ssub.s32 %s24, %s36
    %p162 = scmp.eq.s32.totalorder %s161, 0
    %s164 = sadd.s32 %s163, 1
    %s165 = scalar_select %p162, %s163, %s164
    %p168 = pneg %p162
    %p169 = scmp.eq.s32.totalorder %s17, 1
    %p170 = por %p168, %p169
    %p171 = scmp.ne.s32.totalorder %s163, %s166
    %p172 = scmp.eq.s32.totalorder %s17, 0
    %p173 = por %p171, %p172
    %p174 = scmp.ne.s32.totalorder %s163, %s166
    %p175 = scmp.eq.s32.totalorder %s22, 1
    %p176 = por %p174, %p175
    %p177 = scmp.ne.s32.totalorder %s166, %s167
    %p178 = scmp.eq.s32.totalorder %s22, 0
    %p179 = por %p177, %p178
    %p180 = scmp.ne.s32.totalorder %s166, %s167
    %p181 = scmp.eq.s32.totalorder %s23, 1
    %p182 = por %p180, %p181
    %p184 = scmp.ne.s32.totalorder %s167, %s183
    %p185 = scmp.eq.s32.totalorder %s23, 0
    %p186 = por %p184, %p185
    %s187 = ssub.s32 %s24, %s36
    %p188 = scmp.eq.s32.totalorder %s187, 0
    %s190 = sadd.s32 %s189, 1
    %s191 = scalar_select %p188, %s189, %s190
    %p194 = pneg %p188
    %p195 = scmp.eq.s32.totalorder %s17, 1
    %p196 = por %p194, %p195
    %p197 = scmp.ne.s32.totalorder %s189, %s192
    %p198 = scmp.eq.s32.totalorder %s17, 0
    %p199 = por %p197, %p198
    %p200 = scmp.ne.s32.totalorder %s189, %s192
    %p201 = scmp.eq.s32.totalorder %s22, 1
    %p202 = por %p200, %p201
    %p203 = scmp.ne.s32.totalorder %s192, %s193
    %p204 = scmp.eq.s32.totalorder %s22, 0
    %p205 = por %p203, %p204
    %p206 = scmp.ne.s32.totalorder %s192, %s193
    %p207 = scmp.eq.s32.totalorder %s23, 1
    %p208 = por %p206, %p207
    %p210 = scmp.ne.s32.totalorder %s193, %s209
    %p211 = scmp.eq.s32.totalorder %s23, 0
    %p212 = por %p210, %p211
    %s213 = ssub.s32 %s24, %s36
    %p214 = scmp.eq.s32.totalorder %s213, 0
    %s216 = sadd.s32 %s215, 1
    %s217 = scalar_select %p214, %s215, %s216
    %p220 = pneg %p214
    %p221 = scmp.eq.s32.totalorder %s17, 1
    %p222 = por %p220, %p221
    %p223 = scmp.ne.s32.totalorder %s215, %s218
    %p224 = scmp.eq.s32.totalorder %s17, 0
    %p225 = por %p223, %p224
    %p226 = scmp.ne.s32.totalorder %s215, %s218
    %p227 = scmp.eq.s32.totalorder %s22, 1
    %p228 = por %p226, %p227
    %p229 = scmp.ne.s32.totalorder %s218, %s219
    %p230 = scmp.eq.s32.totalorder %s22, 0
    %p231 = por %p229, %p230
    %p232 = scmp.ne.s32.totalorder %s218, %s219
    %p233 = scmp.eq.s32.totalorder %s23, 1
    %p234 = por %p232, %p233
    %p236 = scmp.ne.s32.totalorder %s219, %s235
    %p237 = scmp.eq.s32.totalorder %s23, 0
    %p238 = por %p236, %p237
    %s239 = ssub.s32 %s24, %s36
    %p240 = scmp.eq.s32.totalorder %s239, 0
    %s242 = sadd.s32 %s241, 1
    %s243 = scalar_select %p240, %s241, %s242
    %p246 = pneg %p240
    %p247 = scmp.eq.s32.totalorder %s17, 1
    %p248 = por %p246, %p247
    %p249 = scmp.ne.s32.totalorder %s241, %s244
    %p250 = scmp.eq.s32.totalorder %s17, 0
    %p251 = por %p249, %p250
    %p252 = scmp.ne.s32.totalorder %s241, %s244
    %p253 = scmp.eq.s32.totalorder %s22, 1
    %p254 = por %p252, %p253
    %p255 = scmp.ne.s32.totalorder %s244, %s245
    %p256 = scmp.eq.s32.totalorder %s22, 0
    %p257 = por %p255, %p256
    %p258 = scmp.ne.s32.totalorder %s244, %s245
    %p259 = scmp.eq.s32.totalorder %s23, 1
    %p260 = por %p258, %p259
    %p262 = scmp.ne.s32.totalorder %s245, %s261
    %p263 = scmp.eq.s32.totalorder %s23, 0
    %p264 = por %p262, %p263
    %s265 = ssub.s32 1, %s24
    %s266 = smul.u32 %s265, %s25
    %s267 = ssub.s32 0, %s25
    %s268 = smul.u32 %s24, %s267
    %s269 = sadd.s32 %s266, %s268
    %s270 = ssub.s32 1, %s36
    %s271 = smul.u32 %s270, %s32
    %s272 = ssub.s32 0, %s32
    %s273 = smul.u32 %s36, %s272
    %s274 = sadd.s32 %s271, %s273
    %s275 = ssub.s32 %s24, %s36
    %s276 = ssub.s32 %s269, %s274
    %s277 = sor.u32 %s275, %s276
    %p278 = scmp.eq.s32.totalorder %s277, 0
    %s280 = sadd.s32 %s279, 1
    %s281 = scalar_select %p278, %s279, %s280
    %p284 = pneg %p278
    %p285 = scmp.eq.s32.totalorder %s17, 1
    %p286 = por %p284, %p285
    %p287 = scmp.ne.s32.totalorder %s279, %s282
    %p288 = scmp.eq.s32.totalorder %s17, 0
    %p289 = por %p287, %p288
    %p290 = scmp.ne.s32.totalorder %s279, %s282
    %p291 = scmp.eq.s32.totalorder %s22, 1
    %p292 = por %p290, %p291
    %p293 = scmp.ne.s32.totalorder %s282, %s283
    %p294 = scmp.eq.s32.totalorder %s22, 0
    %p295 = por %p293, %p294
    %p296 = scmp.ne.s32.totalorder %s282, %s283
    %p297 = scmp.eq.s32.totalorder %s23, 1
    %p298 = por %p296, %p297
    %p300 = scmp.ne.s32.totalorder %s283, %s299
    %p301 = scmp.eq.s32.totalorder %s23, 0
    %p302 = por %p300, %p301
    %s303 = ssub.s32 %s24, %s36
    %p304 = scmp.eq.s32.totalorder %s303, 0
    %s306 = sadd.s32 %s305, 1
    %s307 = scalar_select %p304, %s305, %s306
    %p310 = pneg %p304
    %p311 = scmp.eq.s32.totalorder %s17, 1
    %p312 = por %p310, %p311
    %p313 = scmp.ne.s32.totalorder %s305, %s308
    %p314 = scmp.eq.s32.totalorder %s17, 0
    %p315 = por %p313, %p314
    %p316 = scmp.ne.s32.totalorder %s305, %s308
    %p317 = scmp.eq.s32.totalorder %s22, 1
    %p318 = por %p316, %p317
    %p319 = scmp.ne.s32.totalorder %s308, %s309
    %p320 = scmp.eq.s32.totalorder %s22, 0
    %p321 = por %p319, %p320
    %p322 = scmp.ne.s32.totalorder %s308, %s309
    %p323 = scmp.eq.s32.totalorder %s23, 1
    %p324 = por %p322, %p323
    %p326 = scmp.ne.s32.totalorder %s309, %s325
    %p327 = scmp.eq.s32.totalorder %s23, 0
    %p328 = por %p326, %p327
    %s329 = ssub.s32 %s24, %s36
    %p330 = scmp.eq.s32.totalorder %s329, 0
    %s332 = sadd.s32 %s331, 1
    %s333 = scalar_select %p330, %s331, %s332
    %p336 = pneg %p330
    %p337 = scmp.eq.s32.totalorder %s17, 1
    %p338 = por %p336, %p337
    %p339 = scmp.ne.s32.totalorder %s331, %s334
    %p340 = scmp.eq.s32.totalorder %s17, 0
    %p341 = por %p339, %p340
    %p342 = scmp.ne.s32.totalorder %s331, %s334
    %p343 = scmp.eq.s32.totalorder %s22, 1
    %p344 = por %p342, %p343
    %p345 = scmp.ne.s32.totalorder %s334, %s335
    %p346 = scmp.eq.s32.totalorder %s22, 0
    %p347 = por %p345, %p346
    %p348 = scmp.ne.s32.totalorder %s334, %s335
    %p349 = scmp.eq.s32.totalorder %s23, 1
    %p350 = por %p348, %p349
    %p352 = scmp.ne.s32.totalorder %s335, %s351
    %p353 = scmp.eq.s32.totalorder %s23, 0
    %p354 = por %p352, %p353
    %p355 = scmp.le.s32.totalorder 1, %s17
    %p356 = scmp.lt.s32.totalorder %s17, 3
    %p357 = pnand %p355, %p356
    %p358 = pneg %p357
    // Predicated region
    $region9: #{nmt_decoder_ba_forward.1} parent=5 // pred_check
      _
    $region10: #{nmt_decoder_ba_forward.1} parent=5 // pred_check_branch
      %360 = sbr.rel (%p357) target = $region12
    $region11: #{nmt_decoder_ba_forward.1} parent=5 // pred_region
      %s361 = ssub.s32 %s17, 1
    $region12: #{nmt_decoder_ba_forward.1} parent=5 // pred_fallthru
      _
    %p362 = scmp.lt.s32.totalorder %s17, 2
    // Predicated region
    $region13: #{nmt_decoder_ba_forward.1} parent=5 // pred_check
      %p363 = pneg %p362
    $region14: #{nmt_decoder_ba_forward.1} parent=5 // pred_check_branch
      %365 = sbr.rel (%p363) target = $region16
    $region15: #{nmt_decoder_ba_forward.1} parent=5 // pred_region
      // Predicated region
      $region17: #{nmt_decoder_ba_forward.1} parent=15 // pred_check
        %p366 = pneg %p59
      $region18: #{nmt_decoder_ba_forward.1} parent=15 // pred_check_branch
        %368 = sbr.rel (%p366) target = $region20
      $region19: #{nmt_decoder_ba_forward.1} parent=15 // pred_region
        %s369 = ssub.s32 1, %s24
        %s370 = smul.u32 %s369, %s25
        %s371 = ssub.s32 0, %s25
        %s372 = smul.u32 %s24, %s371
        %s373 = sadd.s32 %s370, %s372
        %s374 = smul.u32 8, %s373
        %p375 = scmp.lt.s32.totalorder %s374, 7
        %s376 = scalar_select %p375, %s374, 7
        %s377 = smul.addr %s376, 4
        %s378 = scalar_lea.vmem %s0, %s377
        %s379 = ssub.s32 1, %s24
        %s380 = smul.u32 %s379, %s25
        %s381 = ssub.s32 0, %s25
        %s382 = smul.u32 %s24, %s381
        %s383 = sadd.s32 %s380, %s382
        %s384 = smul.u32 8, %s383
      $region20: #{nmt_decoder_ba_forward.1} parent=15 // pred_fallthru
        _
      // Predicated region
      $region21: #{nmt_decoder_ba_forward.1} parent=15 // pred_check
        %p385 = pneg %p95
      $region22: #{nmt_decoder_ba_forward.1} parent=15 // pred_check_branch
        %387 = sbr.rel (%p385) target = $region24
      $region23: #{nmt_decoder_ba_forward.1} parent=15 // pred_region
        %s388 = ssub.s32 1, %s24
        %s389 = smul.u32 %s388, %s25
        %s390 = ssub.s32 0, %s25
        %s391 = smul.u32 %s24, %s390
        %s392 = sadd.s32 %s389, %s391
        %s393 = smul.u32 8, %s392
        %p394 = scmp.lt.s32.totalorder %s393, 7
        %s395 = scalar_select %p394, %s393, 7
        %s396 = smul.addr %s395, 4
        %s397 = scalar_lea.vmem %s1, %s396
        %s398 = ssub.s32 1, %s24
        %s399 = smul.u32 %s398, %s25
        %s400 = ssub.s32 0, %s25
        %s401 = smul.u32 %s24, %s400
        %s402 = sadd.s32 %s399, %s401
        %s403 = smul.u32 8, %s402
      $region24: #{nmt_decoder_ba_forward.1} parent=15 // pred_fallthru
        _
      // Predicated region
      $region25: #{nmt_decoder_ba_forward.1} parent=15 // pred_check
        %p404 = pneg %p121
      $region26: #{nmt_decoder_ba_forward.1} parent=15 // pred_check_branch
        %406 = sbr.rel (%p404) target = $region28
      $region27: #{nmt_decoder_ba_forward.1} parent=15 // pred_region
        %p407 = scmp.lt.s32.totalorder %s24, 1
        %s408 = scalar_select %p407, %s24, 1
        %s409 = smul.addr %s408, 4
        %s410 = smul.addr %s409, 4
        %s411 = scalar_lea.vmem %s2, %s410
      $region28: #{nmt_decoder_ba_forward.1} parent=15 // pred_fallthru
        _
      // Predicated region
      $region29: #{nmt_decoder_ba_forward.1} parent=15 // pred_check
        %p412 = pneg %p147
      $region30: #{nmt_decoder_ba_forward.1} parent=15 // pred_check_branch
        %414 = sbr.rel (%p412) target = $region32
      $region31: #{nmt_decoder_ba_forward.1} parent=15 // pred_region
        %p415 = scmp.lt.s32.totalorder %s24, 1
        %s416 = scalar_select %p415, %s24, 1
        %s417 = smul.addr %s416, 8
        %s418 = smul.addr %s417, 4
        %s419 = scalar_lea.vmem %s3, %s418
      $region32: #{nmt_decoder_ba_forward.1} parent=15 // pred_fallthru
        _
      // Predicated region
      $region33: #{nmt_decoder_ba_forward.1} parent=15 // pred_check
        %p420 = pneg %p173
      $region34: #{nmt_decoder_ba_forward.1} parent=15 // pred_check_branch
        %422 = sbr.rel (%p420) target = $region36
      $region35: #{nmt_decoder_ba_forward.1} parent=15 // pred_region
        %p423 = scmp.lt.s32.totalorder %s24, 1
        %s424 = scalar_select %p423, %s24, 1
        %s425 = smul.addr %s424, 4
        %s426 = smul.addr %s425, 4
        %s427 = scalar_lea.vmem %s4, %s426
      $region36: #{nmt_decoder_ba_forward.1} parent=15 // pred_fallthru
        _
      // Predicated region
      $region37: #{nmt_decoder_ba_forward.1} parent=15 // pred_check
        %p428 = pneg %p199
      $region38: #{nmt_decoder_ba_forward.1} parent=15 // pred_check_branch
        %430 = sbr.rel (%p428) target = $region40
      $region39: #{nmt_decoder_ba_forward.1} parent=15 // pred_region
        %p431 = scmp.lt.s32.totalorder %s24, 1
        %s432 = scalar_select %p431, %s24, 1
        %s433 = scalar_lea.vmem %s5, %s432
      $region40: #{nmt_decoder_ba_forward.1} parent=15 // pred_fallthru
        _
      // Predicated region
      $region41: #{nmt_decoder_ba_forward.1} parent=15 // pred_check
        %p434 = pneg %p225
      $region42: #{nmt_decoder_ba_forward.1} parent=15 // pred_check_branch
        %436 = sbr.rel (%p434) target = $region44
      $region43: #{nmt_decoder_ba_forward.1} parent=15 // pred_region
        %p437 = scmp.lt.s32.totalorder %s24, 1
        %s438 = scalar_select %p437, %s24, 1
        %s439 = smul.addr %s438, 8
        %s440 = scalar_lea.vmem %s6, %s439
      $region44: #{nmt_decoder_ba_forward.1} parent=15 // pred_fallthru
        _
      // Predicated region
      $region45: #{nmt_decoder_ba_forward.1} parent=15 // pred_check
        %p441 = pneg %p251
      $region46: #{nmt_decoder_ba_forward.1} parent=15 // pred_check_branch
        %443 = sbr.rel (%p441) target = $region48
      $region47: #{nmt_decoder_ba_forward.1} parent=15 // pred_region
        %p444 = scmp.lt.s32.totalorder %s24, 1
        %s445 = scalar_select %p444, %s24, 1
        %s446 = smul.addr %s445, 8
        %s447 = scalar_lea.vmem %s7, %s446
      $region48: #{nmt_decoder_ba_forward.1} parent=15 // pred_fallthru
        _
    $region16: #{nmt_decoder_ba_forward.1} parent=5 // pred_fallthru
      _
    %p448 = scmp.le.s32.totalorder 1, %s17
    %p449 = scmp.lt.s32.totalorder %s17, 3
    %p450 = pnand %p448, %p449
    %p451 = pneg %p450
    // Predicated region
    $region49: #{nmt_decoder_ba_forward.1} parent=5 // pred_check
      _
    $region50: #{nmt_decoder_ba_forward.1} parent=5 // pred_check_branch
      %453 = sbr.rel (%p450) target = $region52
    $region51: #{nmt_decoder_ba_forward.1} parent=5 // pred_region
      %s454 = ssub.s32 %s17, 1
      %s455 = ssub.s32 1, %s26
      %s456 = smul.u32 %s455, %s27
      %s457 = ssub.s32 0, %s27
      %s458 = smul.u32 %s26, %s457
      %s459 = sadd.s32 %s456, %s458
      %s460 = smul.u32 8, %s459
      %p461 = scmp.lt.s32.totalorder %s460, 7
      %s462 = scalar_select %p461, %s460, 7
      %s463 = smul.addr %s462, 4
      %s464 = scalar_lea.vmem %s0, %s463
      %p465 = pneg %p65
      %p466 = pneg %p62
      %s467 = ssub.s32 1, %s26
      %s468 = smul.u32 %s467, %s27
      %s469 = ssub.s32 0, %s27
      %s470 = smul.u32 %s26, %s469
      %s471 = sadd.s32 %s468, %s470
      %s472 = smul.u32 8, %s471
      %p473 = scmp.lt.s32.totalorder %s472, 7
      %s474 = scalar_select %p473, %s472, 7
      %s475 = smul.addr %s474, 4
      %s476 = scalar_lea.vmem %s1, %s475
      %p477 = pneg %p101
      %p478 = pneg %p98
      %p479 = scmp.lt.s32.totalorder %s26, 1
      %s480 = scalar_select %p479, %s26, 1
      %s481 = smul.addr %s480, 4
      %s482 = smul.addr %s481, 4
      %s483 = scalar_lea.vmem %s2, %s482
      %p484 = pneg %p127
      %p485 = pneg %p124
      %p486 = scmp.lt.s32.totalorder %s26, 1
      %s487 = scalar_select %p486, %s26, 1
      %s488 = smul.addr %s487, 8
      %s489 = smul.addr %s488, 4
      %s490 = scalar_lea.vmem %s3, %s489
      %p491 = pneg %p153
      %p492 = pneg %p150
      %p493 = scmp.lt.s32.totalorder %s26, 1
      %s494 = scalar_select %p493, %s26, 1
      %s495 = smul.addr %s494, 4
      %s496 = smul.addr %s495, 4
      %s497 = scalar_lea.vmem %s4, %s496
      %p498 = pneg %p179
      %p499 = pneg %p176
      %p500 = scmp.lt.s32.totalorder %s26, 1
      %s501 = scalar_select %p500, %s26, 1
      %s502 = scalar_lea.vmem %s5, %s501
      %p503 = pneg %p205
      %p504 = pneg %p202
      %p505 = scmp.lt.s32.totalorder %s26, 1
      %s506 = scalar_select %p505, %s26, 1
      %s507 = smul.addr %s506, 8
      %s508 = scalar_lea.vmem %s6, %s507
      %p509 = pneg %p231
      %p510 = pneg %p228
      %p511 = scmp.lt.s32.totalorder %s26, 1
      %s512 = scalar_select %p511, %s26, 1
      %s513 = smul.addr %s512, 8
      %s514 = scalar_lea.vmem %s7, %s513
      %p515 = pneg %p257
      %p516 = pneg %p254
      %p517 = pneg %p295
      %p518 = pneg %p292
      %s519 = ssub.s32 1, %s26
      %s520 = smul.u32 %s519, %s27
      %s521 = ssub.s32 0, %s27
      %s522 = smul.u32 %s26, %s521
      %s523 = sadd.s32 %s520, %s522
      %s524 = smul.u32 8, %s523
      %p525 = scmp.lt.s32.totalorder %s26, 1
      %s526 = scalar_select %p525, %s26, 1
      %p527 = scmp.lt.s32.totalorder %s524, 7
      %s528 = scalar_select %p527, %s524, 7
      %s529 = smul.addr %s526, 8
      %s530 = sadd.s32 %s528, %s529
      %s531 = smul.addr %s530, 8
      %s532 = scalar_lea.vmem %s8, %s531
      %p533 = pneg %p321
      %p534 = pneg %p318
      %p535 = scmp.lt.s32.totalorder %s26, 1
      %s536 = scalar_select %p535, %s26, 1
      %s537 = smul.addr %s536, 8
      %s538 = scalar_lea.vmem %s9, %s537
      %p539 = pneg %p347
      %p540 = pneg %p344
      %p541 = scmp.lt.s32.totalorder %s26, 1
      %s542 = scalar_select %p541, %s26, 1
      %s543 = smul.addr %s542, 8
      %s544 = scalar_lea.vmem %s10, %s543
      %s545 = ssub.s32 1, %s26
      %s546 = smul.u32 %s545, %s27
      %s547 = ssub.s32 0, %s27
      %s548 = smul.u32 %s26, %s547
      %s549 = sadd.s32 %s546, %s548
      %s550 = smul.u32 8, %s549
      %p551 = scmp.lt.s32.totalorder %s550, 7
      %s552 = scalar_select %p551, %s550, 7
      %s553 = smul.addr %s552, 4
      %s554 = scalar_lea.vmem %s0, %s553
      %s555 = ssub.s32 1, %s26
      %s556 = smul.u32 %s555, %s27
      %s557 = ssub.s32 0, %s27
      %s558 = smul.u32 %s26, %s557
      %s559 = sadd.s32 %s556, %s558
      %s560 = smul.u32 8, %s559
      %s561 = ssub.s32 1, %s26
      %s562 = smul.u32 %s561, %s27
      %s563 = ssub.s32 0, %s27
      %s564 = smul.u32 %s26, %s563
      %s565 = sadd.s32 %s562, %s564
      %s566 = smul.u32 8, %s565
      %p567 = scmp.lt.s32.totalorder %s566, 7
      %s568 = scalar_select %p567, %s566, 7
      %s569 = smul.addr %s568, 4
      %s570 = scalar_lea.vmem %s1, %s569
      %s571 = ssub.s32 1, %s26
      %s572 = smul.u32 %s571, %s27
      %s573 = ssub.s32 0, %s27
      %s574 = smul.u32 %s26, %s573
      %s575 = sadd.s32 %s572, %s574
      %s576 = smul.u32 8, %s575
      %p577 = scmp.lt.s32.totalorder %s26, 1
      %s578 = scalar_select %p577, %s26, 1
      %s579 = smul.addr %s578, 4
      %s580 = smul.addr %s579, 4
      %s581 = scalar_lea.vmem %s2, %s580
      %p582 = scmp.lt.s32.totalorder %s26, 1
      %s583 = scalar_select %p582, %s26, 1
      %s584 = smul.addr %s583, 8
      %s585 = smul.addr %s584, 4
      %s586 = scalar_lea.vmem %s3, %s585
      %p587 = scmp.lt.s32.totalorder %s26, 1
      %s588 = scalar_select %p587, %s26, 1
      %s589 = smul.addr %s588, 4
      %s590 = smul.addr %s589, 4
      %s591 = scalar_lea.vmem %s4, %s590
      %p592 = scmp.lt.s32.totalorder %s26, 1
      %s593 = scalar_select %p592, %s26, 1
      %s594 = scalar_lea.vmem %s5, %s593
      %p595 = scmp.lt.s32.totalorder %s26, 1
      %s596 = scalar_select %p595, %s26, 1
      %s597 = smul.addr %s596, 8
      %s598 = scalar_lea.vmem %s6, %s597
      %p599 = scmp.lt.s32.totalorder %s26, 1
      %s600 = scalar_select %p599, %s26, 1
      %s601 = smul.addr %s600, 8
      %s602 = scalar_lea.vmem %s7, %s601
      %s603 = ssub.s32 1, %s26
      %s604 = smul.u32 %s603, %s27
      %s605 = ssub.s32 0, %s27
      %s606 = smul.u32 %s26, %s605
      %s607 = sadd.s32 %s604, %s606
      %s608 = smul.u32 8, %s607
      %p609 = scmp.lt.s32.totalorder %s26, 1
      %s610 = scalar_select %p609, %s26, 1
      %p611 = scmp.lt.s32.totalorder %s608, 7
      %s612 = scalar_select %p611, %s608, 7
      %s613 = smul.addr %s610, 8
      %s614 = sadd.s32 %s612, %s613
      %s615 = smul.addr %s614, 8
      %s616 = scalar_lea.vmem %s8, %s615
      %s617 = ssub.s32 1, %s26
      %s618 = smul.u32 %s617, %s27
      %s619 = ssub.s32 0, %s27
      %s620 = smul.u32 %s26, %s619
      %s621 = sadd.s32 %s618, %s620
      %s622 = smul.u32 8, %s621
      %p623 = scmp.lt.s32.totalorder %s26, 1
      %s624 = scalar_select %p623, %s26, 1
      %s625 = smul.addr %s624, 8
      %s626 = scalar_lea.vmem %s9, %s625
      %p627 = scmp.lt.s32.totalorder %s26, 1
      %s628 = scalar_select %p627, %s26, 1
      %s629 = smul.addr %s628, 8
      %s630 = scalar_lea.vmem %s10, %s629
      %p632 = scmp.eq.s32.totalorder %s27, 0
      // Predicated region
      $region53: #{nmt_decoder_ba_forward.1} parent=51 // pred_check
        %p633 = pneg %p632
      $region54: #{nmt_decoder_ba_forward.1} parent=51 // pred_check_branch
        %635 = sbr.rel (%p633) target = $region56
      $region55: #{nmt_decoder_ba_forward.1} parent=51 // pred_region
        %v636 = vld [vmem:[%s598] sm:$0xff]
        %vm637 = vcmask 261120
        %638 = vst.msk [vmem:[%s626] sm:$0xff] %vm637, %v636
        %v639 = vld [vmem:[%s602] sm:$0xff]
        %640 = vst.msk [vmem:[%s630] sm:$0xff] %vm637, %v639
      $region56: #{nmt_decoder_ba_forward.1} parent=51 // pred_fallthru
        _
      %v641 = vld [vmem:[%s554] sm:$0xf]
      %v642 = vld [vmem:[%s554 + $0x4] sm:$0xf]
      %v643 = vld [vmem:[%s554 + $0x8] sm:$0xf]
      %v644 = vld [vmem:[%s554 + $0xc] sm:$0xf]
      %v645 = vld [vmem:[%s554 + $0x10] sm:$0xf]
      %v646 = vld [vmem:[%s554 + $0x14] sm:$0xf]
      %v647 = vld [vmem:[%s554 + $0x18] sm:$0xf]
      %v648 = vld [vmem:[%s554 + $0x1c] sm:$0xf]
      %v649 = vld [vmem:[%s581] sm:$0xf]
      %v650 = vld [vmem:[%s581 + $0x4] sm:$0xf]
      %v651 = vld [vmem:[%s581 + $0x8] sm:$0xf]
      %v652 = vld [vmem:[%s581 + $0xc] sm:$0xf]
      %v653 = vld [vmem:[%s570] sm:$0xf]
      %v654 = vld [vmem:[%s570 + $0x4] sm:$0xf]
      %v655 = vld [vmem:[%s570 + $0x8] sm:$0xf]
      %v656 = vld [vmem:[%s570 + $0xc] sm:$0xf]
      %v657 = vld [vmem:[%s570 + $0x10] sm:$0xf]
      %v658 = vld [vmem:[%s570 + $0x14] sm:$0xf]
      %v659 = vld [vmem:[%s570 + $0x18] sm:$0xf]
      %v660 = vld [vmem:[%s570 + $0x1c] sm:$0xf]
      %v661 = vld [vmem:[%s586] sm:$0xf]
      %v662 = vld [vmem:[%s586 + $0x4] sm:$0xf]
      %v663 = vld [vmem:[%s586 + $0x8] sm:$0xf]
      %v664 = vld [vmem:[%s586 + $0xc] sm:$0xf]
      %v665 = vld [vmem:[%s586 + $0x10] sm:$0xf]
      %v666 = vld [vmem:[%s586 + $0x14] sm:$0xf]
      %v667 = vld [vmem:[%s586 + $0x18] sm:$0xf]
      %v668 = vld [vmem:[%s586 + $0x1c] sm:$0xf]
      %v677 = vunpack.c.l.b16 %v653
      %v678 = vunpack.c.l.b16 %v654
      %v679 = vunpack.c.l.b16 %v655
      %v680 = vunpack.c.l.b16 %v656
      %v681 = vunpack.c.l.b16 %v657
      %v682 = vunpack.c.l.b16 %v658
      %v683 = vunpack.c.l.b16 %v659
      %v684 = vunpack.c.l.b16 %v660
      %v685 = vpack.c.b16 %v678, %v677
      %v686 = vpack.c.b16 %v680, %v679
      %v687 = vpack.c.b16 %v682, %v681
      %v688 = vpack.c.b16 %v684, %v683
      %v697 = vunpack.c.l.b16 %v661
      %v698 = vunpack.c.l.b16 %v662
      %v699 = vunpack.c.l.b16 %v663
      %v700 = vunpack.c.l.b16 %v664
      %v701 = vunpack.c.l.b16 %v665
      %v702 = vunpack.c.l.b16 %v666
      %v703 = vunpack.c.l.b16 %v667
      %v704 = vunpack.c.l.b16 %v668
      %v705 = vpack.c.b16 %v698, %v697
      %v706 = vpack.c.b16 %v700, %v699
      %v707 = vpack.c.b16 %v702, %v701
      %v708 = vpack.c.b16 %v704, %v703
      %vm713 = vcmask 523264
      %v715 = vsel %vm713, %v685, 0
      %v718 = vsel %vm713, %v686, 0
      %v721 = vsel %vm713, %v687, 0
      %v724 = vsel %vm713, %v688, 0
      %726 = vmatprep.subr.bf16.mxu0 0
      %727 = vmatpush1.bf16.msra.mxu0 %v705
      %728 = vmatprep.subr.bf16.mxu0 0
      %729 = vmatpush1.bf16.msra.mxu0 %v706
      %730 = vmatprep.subr.bf16.mxu0 0
      %731 = vmatpush1.bf16.msra.mxu0 %v707
      %732 = vmatprep.subr.bf16.mxu0 0
      %733 = vmatpush1.bf16.msra.mxu0 %v708
      %734 = vmatprep.subr.bf16.mxu0 0
      %735 = vmatpush1.bf16.msra.mxu0 0
      %736 = vmatprep.subr.bf16.mxu0 0
      %737 = vmatpush1.bf16.msra.mxu0 0
      %738 = vmatprep.subr.bf16.mxu0 0
      %739 = vmatpush1.bf16.msra.mxu0 0
      %740 = vmatprep.subr.bf16.mxu0 0
      %741 = vmatpush1.bf16.msra.mxu0 0
      %742 = vmatprep.subr.bf16.mxu0 0
      %743 = vmatpush1.bf16.msra.mxu0 0
      %744 = vmatprep.subr.bf16.mxu0 0
      %745 = vmatpush1.bf16.msra.mxu0 0
      %746 = vmatprep.subr.bf16.mxu0 0
      %747 = vmatpush1.bf16.msra.mxu0 0
      %748 = vmatprep.subr.bf16.mxu0 0
      %749 = vmatpush1.bf16.msra.mxu0 0
      %750 = vmatprep.subr.bf16.mxu0 0
      %751 = vmatpush1.bf16.msra.mxu0 0
      %752 = vmatprep.subr.bf16.mxu0 0
      %753 = vmatpush1.bf16.msra.mxu0 0
      %754 = vmatprep.subr.bf16.mxu0 0
      %755 = vmatpush1.bf16.msra.mxu0 0
      %756 = vmatprep.subr.bf16.mxu0 0
      %757 = vmatpush1.bf16.msra.mxu0 0
      %758 = vmatprep.mubr.bf16.mxu0 0
      %759 = vmatmul.mubr.bf16.gmra.mrb[0].mxu0 %v715
      %v760 = vpop.f32.mrb[0].mxu0
      %v761 = vadd.f32 0.0, %v760
      %v762 = vpop.f32.mrb[0].mxu0
      %v763 = vpop.f32.mrb[0].mxu0
      %v764 = vadd.f32 0.0, %v763
      %v765 = vpop.f32.mrb[0].mxu0
      %766 = vmatprep.mubr.bf16.mxu0 0
      %767 = vmatmul.mubr.bf16.gmra.mrb[0].mxu0 %v718
      %v768 = vpop.f32.mrb[0].mxu0
      %v769 = vadd.f32 0.0, %v768
      %v770 = vpop.f32.mrb[0].mxu0
      %v771 = vpop.f32.mrb[0].mxu0
      %v772 = vadd.f32 0.0, %v771
      %v773 = vpop.f32.mrb[0].mxu0
      %774 = vmatprep.mubr.bf16.mxu0 0
      %775 = vmatmul.mubr.bf16.gmra.mrb[0].mxu0 %v721
      %v776 = vpop.f32.mrb[0].mxu0
      %v777 = vadd.f32 0.0, %v776
      %v778 = vpop.f32.mrb[0].mxu0
      %v779 = vpop.f32.mrb[0].mxu0
      %v780 = vadd.f32 0.0, %v779
      %v781 = vpop.f32.mrb[0].mxu0
      %782 = vmatprep.mubr.bf16.mxu0 0
      %783 = vmatmul.mubr.bf16.gmra.mrb[0].mxu0 %v724
      %v784 = vpop.f32.mrb[0].mxu0
      %v785 = vadd.f32 0.0, %v784
      %v786 = vpop.f32.mrb[0].mxu0
      %v787 = vpop.f32.mrb[0].mxu0
      %v788 = vadd.f32 0.0, %v787
      %v789 = vpop.f32.mrb[0].mxu0
      %790 = vdwg.mxu0
      %v799 = vunpack.c.l.b16 %v641
      %v800 = vunpack.c.l.b16 %v642
      %v801 = vunpack.c.l.b16 %v643
      %v802 = vunpack.c.l.b16 %v644
      %v803 = vunpack.c.l.b16 %v645
      %v804 = vunpack.c.l.b16 %v646
      %v805 = vunpack.c.l.b16 %v647
      %v806 = vunpack.c.l.b16 %v648
      %v807 = vpack.c.b16 %v800, %v799
      %v808 = vpack.c.b16 %v802, %v801
      %v809 = vpack.c.b16 %v804, %v803
      %v810 = vpack.c.b16 %v806, %v805
      %v815 = vunpack.c.l.b16 %v649
      %v816 = vunpack.c.l.b16 %v650
      %v817 = vunpack.c.l.b16 %v651
      %v818 = vunpack.c.l.b16 %v652
      %v819 = vpack.c.b16 %v816, %v815
      %v820 = vpack.c.b16 %v818, %v817
      %vm823 = vcmask 261120
      %v825 = vsel %vm823, %v807, 0
      %v828 = vsel %vm823, %v808, 0
      %v831 = vsel %vm823, %v809, 0
      %v834 = vsel %vm823, %v810, 0
      %836 = vmatprep.subr.bf16.mxu0 0
      %837 = vmatpush1.bf16.msra.mxu0 %v819
      %838 = vmatprep.subr.bf16.mxu0 0
      %839 = vmatpush1.bf16.msra.mxu0 %v820
      %840 = vmatprep.subr.bf16.mxu0 0
      %841 = vmatpush1.bf16.msra.mxu0 0
      %842 = vmatprep.subr.bf16.mxu0 0
      %843 = vmatpush1.bf16.msra.mxu0 0
      %844 = vmatprep.subr.bf16.mxu0 0
      %845 = vmatpush1.bf16.msra.mxu0 0
      %846 = vmatprep.subr.bf16.mxu0 0
      %847 = vmatpush1.bf16.msra.mxu0 0
      %848 = vmatprep.subr.bf16.mxu0 0
      %849 = vmatpush1.bf16.msra.mxu0 0
      %850 = vmatprep.subr.bf16.mxu0 0
      %851 = vmatpush1.bf16.msra.mxu0 0
      %852 = vmatprep.subr.bf16.mxu0 0
      %853 = vmatpush1.bf16.msra.mxu0 0
      %854 = vmatprep.subr.bf16.mxu0 0
      %855 = vmatpush1.bf16.msra.mxu0 0
      %856 = vmatprep.subr.bf16.mxu0 0
      %857 = vmatpush1.bf16.msra.mxu0 0
      %858 = vmatprep.subr.bf16.mxu0 0
      %859 = vmatpush1.bf16.msra.mxu0 0
      %860 = vmatprep.subr.bf16.mxu0 0
      %861 = vmatpush1.bf16.msra.mxu0 0
      %862 = vmatprep.subr.bf16.mxu0 0
      %863 = vmatpush1.bf16.msra.mxu0 0
      %864 = vmatprep.subr.bf16.mxu0 0
      %865 = vmatpush1.bf16.msra.mxu0 0
      %866 = vmatprep.subr.bf16.mxu0 0
      %867 = vmatpush1.bf16.msra.mxu0 0
      %868 = vmatprep.mubr.bf16.mxu0 0
      %869 = vmatmul.mubr.bf16.gmra.mrb[0].mxu0 %v825
      %v870 = vpop.f32.mrb[0].mxu0
      %v871 = vadd.f32 %v761, %v870
      %v872 = vpop.f32.mrb[0].mxu0
      %v873 = vpop.f32.mrb[0].mxu0
      %v874 = vadd.f32 %v764, %v873
      %v875 = vpop.f32.mrb[0].mxu0
      %876 = vmatprep.mubr.bf16.mxu0 0
      %877 = vmatmul.mubr.bf16.gmra.mrb[0].mxu0 %v828
      %v878 = vpop.f32.mrb[0].mxu0
      %v879 = vadd.f32 %v769, %v878
      %v880 = vpop.f32.mrb[0].mxu0
      %v881 = vpop.f32.mrb[0].mxu0
      %v882 = vadd.f32 %v772, %v881
      %v883 = vpop.f32.mrb[0].mxu0
      %884 = vmatprep.mubr.bf16.mxu0 0
      %885 = vmatmul.mubr.bf16.gmra.mrb[0].mxu0 %v831
      %v886 = vpop.f32.mrb[0].mxu0
      %v887 = vadd.f32 %v777, %v886
      %v888 = vpop.f32.mrb[0].mxu0
      %v889 = vpop.f32.mrb[0].mxu0
      %v890 = vadd.f32 %v780, %v889
      %v891 = vpop.f32.mrb[0].mxu0
      %892 = vmatprep.mubr.bf16.mxu0 0
      %893 = vmatmul.mubr.bf16.gmra.mrb[0].mxu0 %v834
      %v894 = vpop.f32.mrb[0].mxu0
      %v895 = vadd.f32 %v785, %v894
      %v896 = vpop.f32.mrb[0].mxu0
      %v897 = vpop.f32.mrb[0].mxu0
      %v898 = vadd.f32 %v788, %v897
      %v899 = vpop.f32.mrb[0].mxu0
      %900 = vdwg.mxu0
      %v901 = vld [vmem:[%s594] sm:$0x1]
      %v903 = vlaneseq
      %v904 = vshrl.u32 %v903, 7
      %v905 = vsub.s32 0, %v904
      %v906 = vrot.slane %v901, %v905
      %v908 = vadd.f32 %v871, %v906
      %v909 = vadd.f32 %v874, %v906
      %v910 = vadd.f32 %v879, %v906
      %v911 = vadd.f32 %v882, %v906
      %v912 = vadd.f32 %v887, %v906
      %v913 = vadd.f32 %v890, %v906
      %v914 = vadd.f32 %v895, %v906
      %v915 = vadd.f32 %v898, %v906
      %916 = vst [vmem:[#allocation2] sm:$0xff] %v908
      %917 = vst [vmem:[#allocation2 + $0x8] sm:$0xff] %v909
      %918 = vst [vmem:[#allocation2 + $0x10] sm:$0xff] %v910
      %919 = vst [vmem:[#allocation2 + $0x18] sm:$0xff] %v911
      %920 = vst [vmem:[#allocation2 + $0x20] sm:$0xff] %v912
      %921 = vst [vmem:[#allocation2 + $0x28] sm:$0xff] %v913
      %922 = vst [vmem:[#allocation2 + $0x30] sm:$0xff] %v914
      %923 = vst [vmem:[#allocation2 + $0x38] sm:$0xff] %v915
      %v924 = vld [vmem:[%s591] sm:$0xf]
      %v925 = vld [vmem:[%s591 + $0x4] sm:$0xf]
      %v926 = vld [vmem:[%s591 + $0x8] sm:$0xf]
      %v927 = vld [vmem:[%s591 + $0xc] sm:$0xf]
      %v928 = vld [vmem:[%s626] sm:$0xff]
      %v929 = vld [vmem:[%s630] sm:$0xff]
      %s930 = smul.u32 %s26, 56
      %s931 = scalar_lea.vmem [#allocation2], %s930
      %v932 = vld [vmem:[%s931] sm:$0xff]
      %v933 = vpack.c.bf16 %v928, %v928
      %v938 = vunpack.c.l.b16 %v924
      %v939 = vunpack.c.l.b16 %v925
      %v940 = vunpack.c.l.b16 %v926
      %v941 = vunpack.c.l.b16 %v927
      %v942 = vpack.c.b16 %v939, %v938
      %v943 = vpack.c.b16 %v941, %v940
      %v947 = vsel %vm823, %v933, 0
      %949 = vmatprep.subr.bf16.mxu0 0
      %950 = vmatpush1.bf16.msra.mxu0 %v942
      %951 = vmatprep.subr.bf16.mxu0 0
      %952 = vmatpush1.bf16.msra.mxu0 %v943
      %953 = vmatprep.subr.bf16.mxu0 0
      %954 = vmatpush1.bf16.msra.mxu0 0
      %955 = vmatprep.subr.bf16.mxu0 0
      %956 = vmatpush1.bf16.msra.mxu0 0
      %957 = vmatprep.subr.bf16.mxu0 0
      %958 = vmatpush1.bf16.msra.mxu0 0
      %959 = vmatprep.subr.bf16.mxu0 0
      %960 = vmatpush1.bf16.msra.mxu0 0
      %961 = vmatprep.subr.bf16.mxu0 0
      %962 = vmatpush1.bf16.msra.mxu0 0
      %963 = vmatprep.subr.bf16.mxu0 0
      %964 = vmatpush1.bf16.msra.mxu0 0
      %965 = vmatprep.subr.bf16.mxu0 0
      %966 = vmatpush1.bf16.msra.mxu0 0
      %967 = vmatprep.subr.bf16.mxu0 0
      %968 = vmatpush1.bf16.msra.mxu0 0
      %969 = vmatprep.subr.bf16.mxu0 0
      %970 = vmatpush1.bf16.msra.mxu0 0
      %971 = vmatprep.subr.bf16.mxu0 0
      %972 = vmatpush1.bf16.msra.mxu0 0
      %973 = vmatprep.subr.bf16.mxu0 0
      %974 = vmatpush1.bf16.msra.mxu0 0
      %975 = vmatprep.subr.bf16.mxu0 0
      %976 = vmatpush1.bf16.msra.mxu0 0
      %977 = vmatprep.subr.bf16.mxu0 0
      %978 = vmatpush1.bf16.msra.mxu0 0
      %979 = vmatprep.subr.bf16.mxu0 0
      %980 = vmatpush1.bf16.msra.mxu0 0
      %981 = vmatprep.mubr.bf16.mxu0 0
      %982 = vmatmul.mubr.bf16.gmra.mrb[0].mxu0 %v947
      %v983 = vpop.f32.mrb[0].mxu0
      %v984 = vadd.f32 0.0, %v983
      %v985 = vpop.f32.mrb[0].mxu0
      %v986 = vpop.f32.mrb[0].mxu0
      %v987 = vpop.f32.mrb[0].mxu0
      %988 = vdwg.mxu0
      %v989 = vadd.f32 %v932, %v984
      %v990 = vxor.u32 %v989, 2147483648
      %v991 = vmul.f32 %v990, 1.442695
      %v992 = vpow.pop %v991
      %v993 = vadd.f32 %v992, 1.0
      %v994 = vrcp.pop %v993
      %v995 = vmul.f32 1.0, %v994
      %v996 = vtanh.pop %v989
      %998 = vrot.lane.b32.xlu0 %v929, 32
      %v999 = vpop.permute.xlu0 %998
      %v1001 = vmul.f32 %v995, %v999
      %1003 = vrot.lane.b32.xlu0 %v996, 64
      %v1004 = vpop.permute.xlu0 %1003
      %v1006 = vmul.f32 %v995, %v1004
      %1008 = vrot.lane.b32.xlu0 %v1006, 32
      %v1009 = vpop.permute.xlu0 %1008
      %v1011 = vadd.f32 %v1001, %v1009
      %v1012 = vtanh.pop %v1011
      %1014 = vrot.lane.b32.xlu0 %v1012, 64
      %v1015 = vpop.permute.xlu0 %1014
      %v1017 = vmul.f32 %v995, %v1015
      %1019 = vrot.lane.b32.xlu0 %v1017, 32
      %v1020 = vpop.permute.xlu0 %1019
      %s1022 = scalar_lea.vmem %s616, %s930
      %1023 = vst.msk [vmem:[%s1022] sm:$0xff] %vm823, %v1020
      %s1024 = ssub.s32 1, %s26
      %s1025 = smul.u32 %s26, 6
      %s1026 = sadd.s32 %s1024, %s1025
      %s1027 = smul.u32 %s1026, 8
      %s1028 = scalar_lea.vmem [#allocation2], %s1027
      %v1029 = vld [vmem:[%s1028] sm:$0xff]
      %v1030 = vpack.c.bf16 %v1017, %v1017
      %1032 = vrot.lane.b32.xlu0 %v1030, 32
      %v1033 = vpop.permute.xlu0 %1032
      %v1035 = vsel %vm823, %v1033, 0
      %1037 = vmatprep.subr.bf16.mxu0 0
      %1038 = vmatpush1.bf16.msra.mxu0 %v942
      %1039 = vmatprep.subr.bf16.mxu0 0
      %1040 = vmatpush1.bf16.msra.mxu0 %v943
      %1041 = vmatprep.subr.bf16.mxu0 0
      %1042 = vmatpush1.bf16.msra.mxu0 0
      %1043 = vmatprep.subr.bf16.mxu0 0
      %1044 = vmatpush1.bf16.msra.mxu0 0
      %1045 = vmatprep.subr.bf16.mxu0 0
      %1046 = vmatpush1.bf16.msra.mxu0 0
      %1047 = vmatprep.subr.bf16.mxu0 0
      %1048 = vmatpush1.bf16.msra.mxu0 0
      %1049 = vmatprep.subr.bf16.mxu0 0
      %1050 = vmatpush1.bf16.msra.mxu0 0
      %1051 = vmatprep.subr.bf16.mxu0 0
      %1052 = vmatpush1.bf16.msra.mxu0 0
      %1053 = vmatprep.subr.bf16.mxu0 0
      %1054 = vmatpush1.bf16.msra.mxu0 0
      %1055 = vmatprep.subr.bf16.mxu0 0
      %1056 = vmatpush1.bf16.msra.mxu0 0
      %1057 = vmatprep.subr.bf16.mxu0 0
      %1058 = vmatpush1.bf16.msra.mxu0 0
      %1059 = vmatprep.subr.bf16.mxu0 0
      %1060 = vmatpush1.bf16.msra.mxu0 0
      %1061 = vmatprep.subr.bf16.mxu0 0
      %1062 = vmatpush1.bf16.msra.mxu0 0
      %1063 = vmatprep.subr.bf16.mxu0 0
      %1064 = vmatpush1.bf16.msra.mxu0 0
      %1065 = vmatprep.subr.bf16.mxu0 0
      %1066 = vmatpush1.bf16.msra.mxu0 0
      %1067 = vmatprep.subr.bf16.mxu0 0
      %1068 = vmatpush1.bf16.msra.mxu0 0
      %1069 = vmatprep.mubr.bf16.mxu0 0
      %1070 = vmatmul.mubr.bf16.gmra.mrb[0].mxu0 %v1035
      %v1071 = vpop.f32.mrb[0].mxu0
      %v1072 = vadd.f32 0.0, %v1071
      %v1073 = vpop.f32.mrb[0].mxu0
      %v1074 = vpop.f32.mrb[0].mxu0
      %v1075 = vpop.f32.mrb[0].mxu0
      %1076 = vdwg.mxu0
      %v1077 = vadd.f32 %v1029, %v1072
      %v1078 = vxor.u32 %v1077, 2147483648
      %v1079 = vmul.f32 %v1078, 1.442695
      %v1080 = vpow.pop %v1079
      %v1081 = vadd.f32 %v1080, 1.0
      %v1082 = vrcp.pop %v1081
      %v1083 = vmul.f32 1.0, %v1082
      %v1084 = vtanh.pop %v1077
      %v1085 = vmul.f32 %v1083, %v1011
      %1087 = vrot.lane.b32.xlu0 %v1084, 64
      %v1088 = vpop.permute.xlu0 %1087
      %v1090 = vmul.f32 %v1083, %v1088
      %1092 = vrot.lane.b32.xlu0 %v1090, 32
      %v1093 = vpop.permute.xlu0 %1092
      %v1095 = vadd.f32 %v1085, %v1093
      %v1096 = vtanh.pop %v1095
      %1098 = vrot.lane.b32.xlu0 %v1096, 64
      %v1099 = vpop.permute.xlu0 %1098
      %v1101 = vmul.f32 %v1083, %v1099
      %1103 = vrot.lane.b32.xlu0 %v1101, 32
      %v1104 = vpop.permute.xlu0 %1103
      %s1106 = scalar_lea.vmem %s616, %s1027
      %1107 = vst.msk [vmem:[%s1106] sm:$0xff] %vm823, %v1104
      %s1108 = smul.u32 %s1024, 2
      %s1109 = smul.u32 %s26, 5
      %s1110 = sadd.s32 %s1108, %s1109
      %s1111 = smul.u32 %s1110, 8
      %s1112 = scalar_lea.vmem [#allocation2], %s1111
      %v1113 = vld [vmem:[%s1112] sm:$0xff]
      %v1114 = vpack.c.bf16 %v1101, %v1101
      %1116 = vrot.lane.b32.xlu0 %v1114, 32
      %v1117 = vpop.permute.xlu0 %1116
      %v1119 = vsel %vm823, %v1117, 0
      %1121 = vmatprep.subr.bf16.mxu0 0
      %1122 = vmatpush1.bf16.msra.mxu0 %v942
      %1123 = vmatprep.subr.bf16.mxu0 0
      %1124 = vmatpush1.bf16.msra.mxu0 %v943
      %1125 = vmatprep.subr.bf16.mxu0 0
      %1126 = vmatpush1.bf16.msra.mxu0 0
      %1127 = vmatprep.subr.bf16.mxu0 0
      %1128 = vmatpush1.bf16.msra.mxu0 0
      %1129 = vmatprep.subr.bf16.mxu0 0
      %1130 = vmatpush1.bf16.msra.mxu0 0
      %1131 = vmatprep.subr.bf16.mxu0 0
      %1132 = vmatpush1.bf16.msra.mxu0 0
      %1133 = vmatprep.subr.bf16.mxu0 0
      %1134 = vmatpush1.bf16.msra.mxu0 0
      %1135 = vmatprep.subr.bf16.mxu0 0
      %1136 = vmatpush1.bf16.msra.mxu0 0
      %1137 = vmatprep.subr.bf16.mxu0 0
      %1138 = vmatpush1.bf16.msra.mxu0 0
      %1139 = vmatprep.subr.bf16.mxu0 0
      %1140 = vmatpush1.bf16.msra.mxu0 0
      %1141 = vmatprep.subr.bf16.mxu0 0
      %1142 = vmatpush1.bf16.msra.mxu0 0
      %1143 = vmatprep.subr.bf16.mxu0 0
      %1144 = vmatpush1.bf16.msra.mxu0 0
      %1145 = vmatprep.subr.bf16.mxu0 0
      %1146 = vmatpush1.bf16.msra.mxu0 0
      %1147 = vmatprep.subr.bf16.mxu0 0
      %1148 = vmatpush1.bf16.msra.mxu0 0
      %1149 = vmatprep.subr.bf16.mxu0 0
      %1150 = vmatpush1.bf16.msra.mxu0 0
      %1151 = vmatprep.subr.bf16.mxu0 0
      %1152 = vmatpush1.bf16.msra.mxu0 0
      %1153 = vmatprep.mubr.bf16.mxu0 0
      %1154 = vmatmul.mubr.bf16.gmra.mrb[0].mxu0 %v1119
      %v1155 = vpop.f32.mrb[0].mxu0
      %v1156 = vadd.f32 0.0, %v1155
      %v1157 = vpop.f32.mrb[0].mxu0
      %v1158 = vpop.f32.mrb[0].mxu0
      %v1159 = vpop.f32.mrb[0].mxu0
      %1160 = vdwg.mxu0
      %v1161 = vadd.f32 %v1113, %v1156
      %v1162 = vxor.u32 %v1161, 2147483648
      %v1163 = vmul.f32 %v1162, 1.442695
      %v1164 = vpow.pop %v1163
      %v1165 = vadd.f32 %v1164, 1.0
      %v1166 = vrcp.pop %v1165
      %v1167 = vmul.f32 1.0, %v1166
      %v1168 = vtanh.pop %v1161
      %v1169 = vmul.f32 %v1167, %v1095
      %1171 = vrot.lane.b32.xlu0 %v1168, 64
      %v1172 = vpop.permute.xlu0 %1171
      %v1174 = vmul.f32 %v1167, %v1172
      %1176 = vrot.lane.b32.xlu0 %v1174, 32
      %v1177 = vpop.permute.xlu0 %1176
      %v1179 = vadd.f32 %v1169, %v1177
      %v1180 = vtanh.pop %v1179
      %1182 = vrot.lane.b32.xlu0 %v1180, 64
      %v1183 = vpop.permute.xlu0 %1182
      %v1185 = vmul.f32 %v1167, %v1183
      %1187 = vrot.lane.b32.xlu0 %v1185, 32
      %v1188 = vpop.permute.xlu0 %1187
      %s1190 = scalar_lea.vmem %s616, %s1111
      %1191 = vst.msk [vmem:[%s1190] sm:$0xff] %vm823, %v1188
      %s1192 = smul.u32 %s1024, 3
      %s1193 = smul.u32 %s26, 4
      %s1194 = sadd.s32 %s1192, %s1193
      %s1195 = smul.u32 %s1194, 8
      %s1196 = scalar_lea.vmem [#allocation2], %s1195
      %v1197 = vld [vmem:[%s1196] sm:$0xff]
      %v1198 = vpack.c.bf16 %v1185, %v1185
      %1200 = vrot.lane.b32.xlu0 %v1198, 32
      %v1201 = vpop.permute.xlu0 %1200
      %v1203 = vsel %vm823, %v1201, 0
      %1205 = vmatprep.subr.bf16.mxu0 0
      %1206 = vmatpush1.bf16.msra.mxu0 %v942
      %1207 = vmatprep.subr.bf16.mxu0 0
      %1208 = vmatpush1.bf16.msra.mxu0 %v943
      %1209 = vmatprep.subr.bf16.mxu0 0
      %1210 = vmatpush1.bf16.msra.mxu0 0
      %1211 = vmatprep.subr.bf16.mxu0 0
      %1212 = vmatpush1.bf16.msra.mxu0 0
      %1213 = vmatprep.subr.bf16.mxu0 0
      %1214 = vmatpush1.bf16.msra.mxu0 0
      %1215 = vmatprep.subr.bf16.mxu0 0
      %1216 = vmatpush1.bf16.msra.mxu0 0
      %1217 = vmatprep.subr.bf16.mxu0 0
      %1218 = vmatpush1.bf16.msra.mxu0 0
      %1219 = vmatprep.subr.bf16.mxu0 0
      %1220 = vmatpush1.bf16.msra.mxu0 0
      %1221 = vmatprep.subr.bf16.mxu0 0
      %1222 = vmatpush1.bf16.msra.mxu0 0
      %1223 = vmatprep.subr.bf16.mxu0 0
      %1224 = vmatpush1.bf16.msra.mxu0 0
      %1225 = vmatprep.subr.bf16.mxu0 0
      %1226 = vmatpush1.bf16.msra.mxu0 0
      %1227 = vmatprep.subr.bf16.mxu0 0
      %1228 = vmatpush1.bf16.msra.mxu0 0
      %1229 = vmatprep.subr.bf16.mxu0 0
      %1230 = vmatpush1.bf16.msra.mxu0 0
      %1231 = vmatprep.subr.bf16.mxu0 0
      %1232 = vmatpush1.bf16.msra.mxu0 0
      %1233 = vmatprep.subr.bf16.mxu0 0
      %1234 = vmatpush1.bf16.msra.mxu0 0
      %1235 = vmatprep.subr.bf16.mxu0 0
      %1236 = vmatpush1.bf16.msra.mxu0 0
      %1237 = vmatprep.mubr.bf16.mxu0 0
      %1238 = vmatmul.mubr.bf16.gmra.mrb[0].mxu0 %v1203
      %v1239 = vpop.f32.mrb[0].mxu0
      %v1240 = vadd.f32 0.0, %v1239
      %v1241 = vpop.f32.mrb[0].mxu0
      %v1242 = vpop.f32.mrb[0].mxu0
      %v1243 = vpop.f32.mrb[0].mxu0
      %1244 = vdwg.mxu0
      %v1245 = vadd.f32 %v1197, %v1240
      %v1246 = vxor.u32 %v1245, 2147483648
      %v1247 = vmul.f32 %v1246, 1.442695
      %v1248 = vpow.pop %v1247
      %v1249 = vadd.f32 %v1248, 1.0
      %v1250 = vrcp.pop %v1249
      %v1251 = vmul.f32 1.0, %v1250
      %v1252 = vtanh.pop %v1245
      %v1253 = vmul.f32 %v1251, %v1179
      %1255 = vrot.lane.b32.xlu0 %v1252, 64
      %v1256 = vpop.permute.xlu0 %1255
      %v1258 = vmul.f32 %v1251, %v1256
      %1260 = vrot.lane.b32.xlu0 %v1258, 32
      %v1261 = vpop.permute.xlu0 %1260
      %v1263 = vadd.f32 %v1253, %v1261
      %v1264 = vtanh.pop %v1263
      %1266 = vrot.lane.b32.xlu0 %v1264, 64
      %v1267 = vpop.permute.xlu0 %1266
      %v1269 = vmul.f32 %v1251, %v1267
      %1271 = vrot.lane.b32.xlu0 %v1269, 32
      %v1272 = vpop.permute.xlu0 %1271
      %s1274 = scalar_lea.vmem %s616, %s1195
      %1275 = vst.msk [vmem:[%s1274] sm:$0xff] %vm823, %v1272
      %s1276 = smul.u32 %s1024, 4
      %s1277 = smul.u32 %s26, 3
      %s1278 = sadd.s32 %s1276, %s1277
      %s1279 = smul.u32 %s1278, 8
      %s1280 = scalar_lea.vmem [#allocation2], %s1279
      %v1281 = vld [vmem:[%s1280] sm:$0xff]
      %v1282 = vpack.c.bf16 %v1269, %v1269
      %1284 = vrot.lane.b32.xlu0 %v1282, 32
      %v1285 = vpop.permute.xlu0 %1284
      %v1287 = vsel %vm823, %v1285, 0
      %1289 = vmatprep.subr.bf16.mxu0 0
      %1290 = vmatpush1.bf16.msra.mxu0 %v942
      %1291 = vmatprep.subr.bf16.mxu0 0
      %1292 = vmatpush1.bf16.msra.mxu0 %v943
      %1293 = vmatprep.subr.bf16.mxu0 0
      %1294 = vmatpush1.bf16.msra.mxu0 0
      %1295 = vmatprep.subr.bf16.mxu0 0
      %1296 = vmatpush1.bf16.msra.mxu0 0
      %1297 = vmatprep.subr.bf16.mxu0 0
      %1298 = vmatpush1.bf16.msra.mxu0 0
      %1299 = vmatprep.subr.bf16.mxu0 0
      %1300 = vmatpush1.bf16.msra.mxu0 0
      %1301 = vmatprep.subr.bf16.mxu0 0
      %1302 = vmatpush1.bf16.msra.mxu0 0
      %1303 = vmatprep.subr.bf16.mxu0 0
      %1304 = vmatpush1.bf16.msra.mxu0 0
      %1305 = vmatprep.subr.bf16.mxu0 0
      %1306 = vmatpush1.bf16.msra.mxu0 0
      %1307 = vmatprep.subr.bf16.mxu0 0
      %1308 = vmatpush1.bf16.msra.mxu0 0
      %1309 = vmatprep.subr.bf16.mxu0 0
      %1310 = vmatpush1.bf16.msra.mxu0 0
      %1311 = vmatprep.subr.bf16.mxu0 0
      %1312 = vmatpush1.bf16.msra.mxu0 0
      %1313 = vmatprep.subr.bf16.mxu0 0
      %1314 = vmatpush1.bf16.msra.mxu0 0
      %1315 = vmatprep.subr.bf16.mxu0 0
      %1316 = vmatpush1.bf16.msra.mxu0 0
      %1317 = vmatprep.subr.bf16.mxu0 0
      %1318 = vmatpush1.bf16.msra.mxu0 0
      %1319 = vmatprep.subr.bf16.mxu0 0
      %1320 = vmatpush1.bf16.msra.mxu0 0
      %1321 = vmatprep.mubr.bf16.mxu0 0
      %1322 = vmatmul.mubr.bf16.gmra.mrb[0].mxu0 %v1287
      %v1323 = vpop.f32.mrb[0].mxu0
      %v1324 = vadd.f32 0.0, %v1323
      %v1325 = vpop.f32.mrb[0].mxu0
      %v1326 = vpop.f32.mrb[0].mxu0
      %v1327 = vpop.f32.mrb[0].mxu0
      %1328 = vdwg.mxu0
      %v1329 = vadd.f32 %v1281, %v1324
      %v1330 = vxor.u32 %v1329, 2147483648
      %v1331 = vmul.f32 %v1330, 1.442695
      %v1332 = vpow.pop %v1331
      %v1333 = vadd.f32 %v1332, 1.0
      %v1334 = vrcp.pop %v1333
      %v1335 = vmul.f32 1.0, %v1334
      %v1336 = vtanh.pop %v1329
      %v1337 = vmul.f32 %v1335, %v1263
      %1339 = vrot.lane.b32.xlu0 %v1336, 64
      %v1340 = vpop.permute.xlu0 %1339
      %v1342 = vmul.f32 %v1335, %v1340
      %1344 = vrot.lane.b32.xlu0 %v1342, 32
      %v1345 = vpop.permute.xlu0 %1344
      %v1347 = vadd.f32 %v1337, %v1345
      %v1348 = vtanh.pop %v1347
      %1350 = vrot.lane.b32.xlu0 %v1348, 64
      %v1351 = vpop.permute.xlu0 %1350
      %v1353 = vmul.f32 %v1335, %v1351
      %1355 = vrot.lane.b32.xlu0 %v1353, 32
      %v1356 = vpop.permute.xlu0 %1355
      %s1358 = scalar_lea.vmem %s616, %s1279
      %1359 = vst.msk [vmem:[%s1358] sm:$0xff] %vm823, %v1356
      %s1360 = smul.u32 %s1024, 5
      %s1361 = smul.u32 %s26, 2
      %s1362 = sadd.s32 %s1360, %s1361
      %s1363 = smul.u32 %s1362, 8
      %s1364 = scalar_lea.vmem [#allocation2], %s1363
      %v1365 = vld [vmem:[%s1364] sm:$0xff]
      %v1366 = vpack.c.bf16 %v1353, %v1353
      %1368 = vrot.lane.b32.xlu0 %v1366, 32
      %v1369 = vpop.permute.xlu0 %1368
      %v1371 = vsel %vm823, %v1369, 0
      %1373 = vmatprep.subr.bf16.mxu0 0
      %1374 = vmatpush1.bf16.msra.mxu0 %v942
      %1375 = vmatprep.subr.bf16.mxu0 0
      %1376 = vmatpush1.bf16.msra.mxu0 %v943
      %1377 = vmatprep.subr.bf16.mxu0 0
      %1378 = vmatpush1.bf16.msra.mxu0 0
      %1379 = vmatprep.subr.bf16.mxu0 0
      %1380 = vmatpush1.bf16.msra.mxu0 0
      %1381 = vmatprep.subr.bf16.mxu0 0
      %1382 = vmatpush1.bf16.msra.mxu0 0
      %1383 = vmatprep.subr.bf16.mxu0 0
      %1384 = vmatpush1.bf16.msra.mxu0 0
      %1385 = vmatprep.subr.bf16.mxu0 0
      %1386 = vmatpush1.bf16.msra.mxu0 0
      %1387 = vmatprep.subr.bf16.mxu0 0
      %1388 = vmatpush1.bf16.msra.mxu0 0
      %1389 = vmatprep.subr.bf16.mxu0 0
      %1390 = vmatpush1.bf16.msra.mxu0 0
      %1391 = vmatprep.subr.bf16.mxu0 0
      %1392 = vmatpush1.bf16.msra.mxu0 0
      %1393 = vmatprep.subr.bf16.mxu0 0
      %1394 = vmatpush1.bf16.msra.mxu0 0
      %1395 = vmatprep.subr.bf16.mxu0 0
      %1396 = vmatpush1.bf16.msra.mxu0 0
      %1397 = vmatprep.subr.bf16.mxu0 0
      %1398 = vmatpush1.bf16.msra.mxu0 0
      %1399 = vmatprep.subr.bf16.mxu0 0
      %1400 = vmatpush1.bf16.msra.mxu0 0
      %1401 = vmatprep.subr.bf16.mxu0 0
      %1402 = vmatpush1.bf16.msra.mxu0 0
      %1403 = vmatprep.subr.bf16.mxu0 0
      %1404 = vmatpush1.bf16.msra.mxu0 0
      %1405 = vmatprep.mubr.bf16.mxu0 0
      %1406 = vmatmul.mubr.bf16.gmra.mrb[0].mxu0 %v1371
      %v1407 = vpop.f32.mrb[0].mxu0
      %v1408 = vadd.f32 0.0, %v1407
      %v1409 = vpop.f32.mrb[0].mxu0
      %v1410 = vpop.f32.mrb[0].mxu0
      %v1411 = vpop.f32.mrb[0].mxu0
      %1412 = vdwg.mxu0
      %v1413 = vadd.f32 %v1365, %v1408
      %v1414 = vxor.u32 %v1413, 2147483648
      %v1415 = vmul.f32 %v1414, 1.442695
      %v1416 = vpow.pop %v1415
      %v1417 = vadd.f32 %v1416, 1.0
      %v1418 = vrcp.pop %v1417
      %v1419 = vmul.f32 1.0, %v1418
      %v1420 = vtanh.pop %v1413
      %v1421 = vmul.f32 %v1419, %v1347
      %1423 = vrot.lane.b32.xlu0 %v1420, 64
      %v1424 = vpop.permute.xlu0 %1423
      %v1426 = vmul.f32 %v1419, %v1424
      %1428 = vrot.lane.b32.xlu0 %v1426, 32
      %v1429 = vpop.permute.xlu0 %1428
      %v1431 = vadd.f32 %v1421, %v1429
      %v1432 = vtanh.pop %v1431
      %1434 = vrot.lane.b32.xlu0 %v1432, 64
      %v1435 = vpop.permute.xlu0 %1434
      %v1437 = vmul.f32 %v1419, %v1435
      %1439 = vrot.lane.b32.xlu0 %v1437, 32
      %v1440 = vpop.permute.xlu0 %1439
      %s1442 = scalar_lea.vmem %s616, %s1363
      %1443 = vst.msk [vmem:[%s1442] sm:$0xff] %vm823, %v1440
      %s1444 = smul.u32 %s1024, 6
      %s1445 = sadd.s32 %s1444, %s26
      %s1446 = smul.u32 %s1445, 8
      %s1447 = scalar_lea.vmem [#allocation2], %s1446
      %v1448 = vld [vmem:[%s1447] sm:$0xff]
      %v1449 = vpack.c.bf16 %v1437, %v1437
      %1451 = vrot.lane.b32.xlu0 %v1449, 32
      %v1452 = vpop.permute.xlu0 %1451
      %v1454 = vsel %vm823, %v1452, 0
      %1456 = vmatprep.subr.bf16.mxu0 0
      %1457 = vmatpush1.bf16.msra.mxu0 %v942
      %1458 = vmatprep.subr.bf16.mxu0 0
      %1459 = vmatpush1.bf16.msra.mxu0 %v943
      %1460 = vmatprep.subr.bf16.mxu0 0
      %1461 = vmatpush1.bf16.msra.mxu0 0
      %1462 = vmatprep.subr.bf16.mxu0 0
      %1463 = vmatpush1.bf16.msra.mxu0 0
      %1464 = vmatprep.subr.bf16.mxu0 0
      %1465 = vmatpush1.bf16.msra.mxu0 0
      %1466 = vmatprep.subr.bf16.mxu0 0
      %1467 = vmatpush1.bf16.msra.mxu0 0
      %1468 = vmatprep.subr.bf16.mxu0 0
      %1469 = vmatpush1.bf16.msra.mxu0 0
      %1470 = vmatprep.subr.bf16.mxu0 0
      %1471 = vmatpush1.bf16.msra.mxu0 0
      %1472 = vmatprep.subr.bf16.mxu0 0
      %1473 = vmatpush1.bf16.msra.mxu0 0
      %1474 = vmatprep.subr.bf16.mxu0 0
      %1475 = vmatpush1.bf16.msra.mxu0 0
      %1476 = vmatprep.subr.bf16.mxu0 0
      %1477 = vmatpush1.bf16.msra.mxu0 0
      %1478 = vmatprep.subr.bf16.mxu0 0
      %1479 = vmatpush1.bf16.msra.mxu0 0
      %1480 = vmatprep.subr.bf16.mxu0 0
      %1481 = vmatpush1.bf16.msra.mxu0 0
      %1482 = vmatprep.subr.bf16.mxu0 0
      %1483 = vmatpush1.bf16.msra.mxu0 0
      %1484 = vmatprep.subr.bf16.mxu0 0
      %1485 = vmatpush1.bf16.msra.mxu0 0
      %1486 = vmatprep.subr.bf16.mxu0 0
      %1487 = vmatpush1.bf16.msra.mxu0 0
      %1488 = vmatprep.mubr.bf16.mxu0 0
      %1489 = vmatmul.mubr.bf16.gmra.mrb[0].mxu0 %v1454
      %v1490 = vpop.f32.mrb[0].mxu0
      %v1491 = vadd.f32 0.0, %v1490
      %v1492 = vpop.f32.mrb[0].mxu0
      %v1493 = vpop.f32.mrb[0].mxu0
      %v1494 = vpop.f32.mrb[0].mxu0
      %1495 = vdwg.mxu0
      %v1496 = vadd.f32 %v1448, %v1491
      %v1497 = vxor.u32 %v1496, 2147483648
      %v1498 = vmul.f32 %v1497, 1.442695
      %v1499 = vpow.pop %v1498
      %v1500 = vadd.f32 %v1499, 1.0
      %v1501 = vrcp.pop %v1500
      %v1502 = vmul.f32 1.0, %v1501
      %v1503 = vtanh.pop %v1496
      %v1504 = vmul.f32 %v1502, %v1431
      %1506 = vrot.lane.b32.xlu0 %v1503, 64
      %v1507 = vpop.permute.xlu0 %1506
      %v1509 = vmul.f32 %v1502, %v1507
      %1511 = vrot.lane.b32.xlu0 %v1509, 32
      %v1512 = vpop.permute.xlu0 %1511
      %v1514 = vadd.f32 %v1504, %v1512
      %v1515 = vtanh.pop %v1514
      %1517 = vrot.lane.b32.xlu0 %v1515, 64
      %v1518 = vpop.permute.xlu0 %1517
      %v1520 = vmul.f32 %v1502, %v1518
      %1522 = vrot.lane.b32.xlu0 %v1520, 32
      %v1523 = vpop.permute.xlu0 %1522
      %s1525 = scalar_lea.vmem %s616, %s1446
      %1526 = vst.msk [vmem:[%s1525] sm:$0xff] %vm823, %v1523
      %s1527 = smul.u32 %s1024, 56
      %s1528 = scalar_lea.vmem [#allocation2], %s1527
      %v1529 = vld [vmem:[%s1528] sm:$0xff]
      %v1530 = vpack.c.bf16 %v1520, %v1520
      %1532 = vrot.lane.b32.xlu0 %v1530, 32
      %v1533 = vpop.permute.xlu0 %1532
      %v1535 = vsel %vm823, %v1533, 0
      %1537 = vmatprep.subr.bf16.mxu0 0
      %1538 = vmatpush1.bf16.msra.mxu0 %v942
      %1539 = vmatprep.subr.bf16.mxu0 0
      %1540 = vmatpush1.bf16.msra.mxu0 %v943
      %1541 = vmatprep.subr.bf16.mxu0 0
      %1542 = vmatpush1.bf16.msra.mxu0 0
      %1543 = vmatprep.subr.bf16.mxu0 0
      %1544 = vmatpush1.bf16.msra.mxu0 0
      %1545 = vmatprep.subr.bf16.mxu0 0
      %1546 = vmatpush1.bf16.msra.mxu0 0
      %1547 = vmatprep.subr.bf16.mxu0 0
      %1548 = vmatpush1.bf16.msra.mxu0 0
      %1549 = vmatprep.subr.bf16.mxu0 0
      %1550 = vmatpush1.bf16.msra.mxu0 0
      %1551 = vmatprep.subr.bf16.mxu0 0
      %1552 = vmatpush1.bf16.msra.mxu0 0
      %1553 = vmatprep.subr.bf16.mxu0 0
      %1554 = vmatpush1.bf16.msra.mxu0 0
      %1555 = vmatprep.subr.bf16.mxu0 0
      %1556 = vmatpush1.bf16.msra.mxu0 0
      %1557 = vmatprep.subr.bf16.mxu0 0
      %1558 = vmatpush1.bf16.msra.mxu0 0
      %1559 = vmatprep.subr.bf16.mxu0 0
      %1560 = vmatpush1.bf16.msra.mxu0 0
      %1561 = vmatprep.subr.bf16.mxu0 0
      %1562 = vmatpush1.bf16.msra.mxu0 0
      %1563 = vmatprep.subr.bf16.mxu0 0
      %1564 = vmatpush1.bf16.msra.mxu0 0
      %1565 = vmatprep.subr.bf16.mxu0 0
      %1566 = vmatpush1.bf16.msra.mxu0 0
      %1567 = vmatprep.subr.bf16.mxu0 0
      %1568 = vmatpush1.bf16.msra.mxu0 0
      %1569 = vmatprep.mubr.bf16.mxu0 0
      %1570 = vmatmul.mubr.bf16.gmra.mrb[0].mxu0 %v1535
      %v1571 = vpop.f32.mrb[0].mxu0
      %v1572 = vadd.f32 0.0, %v1571
      %v1573 = vpop.f32.mrb[0].mxu0
      %v1574 = vpop.f32.mrb[0].mxu0
      %v1575 = vpop.f32.mrb[0].mxu0
      %1576 = vdwg.mxu0
      %v1577 = vadd.f32 %v1529, %v1572
      %v1578 = vxor.u32 %v1577, 2147483648
      %v1579 = vmul.f32 %v1578, 1.442695
      %v1580 = vpow.pop %v1579
      %v1581 = vadd.f32 %v1580, 1.0
      %v1582 = vrcp.pop %v1581
      %v1583 = vmul.f32 1.0, %v1582
      %v1584 = vtanh.pop %v1577
      %v1585 = vmul.f32 %v1583, %v1514
      %1587 = vrot.lane.b32.xlu0 %v1584, 64
      %v1588 = vpop.permute.xlu0 %1587
      %v1590 = vmul.f32 %v1583, %v1588
      %1592 = vrot.lane.b32.xlu0 %v1590, 32
      %v1593 = vpop.permute.xlu0 %1592
      %v1595 = vadd.f32 %v1585, %v1593
      %v1596 = vtanh.pop %v1595
      %1598 = vrot.lane.b32.xlu0 %v1596, 64
      %v1599 = vpop.permute.xlu0 %1598
      %v1601 = vmul.f32 %v1583, %v1599
      %1603 = vrot.lane.b32.xlu0 %v1601, 32
      %v1604 = vpop.permute.xlu0 %1603
      %s1606 = scalar_lea.vmem %s616, %s1527
      %1607 = vst.msk [vmem:[%s1606] sm:$0xff] %vm823, %v1604
      %1608 = vst.msk [vmem:[%s626] sm:$0xff] %vm823, %v1604
      %1610 = vrot.lane.b32.xlu0 %v1595, 96
      %v1611 = vpop.permute.xlu0 %1610
      %1613 = vst.msk [vmem:[%s630] sm:$0xff] %vm823, %v1611
      %s1614 = ssub.s32 1, %s26
      %s1615 = smul.u32 %s1614, %s27
      %s1616 = ssub.s32 0, %s27
      %s1617 = smul.u32 %s26, %s1616
      %s1618 = sadd.s32 %s1615, %s1617
      %s1619 = smul.u32 8, %s1618
      %p1620 = scmp.lt.s32.totalorder %s26, 1
      %s1621 = scalar_select %p1620, %s26, 1
      %p1622 = scmp.lt.s32.totalorder %s1619, 7
      %s1623 = scalar_select %p1622, %s1619, 7
      %s1624 = smul.addr %s1621, 8
      %s1625 = sadd.s32 %s1623, %s1624
      %s1626 = smul.addr %s1625, 8
      %s1627 = scalar_lea.vmem %s8, %s1626
      %p1628 = scmp.lt.s32.totalorder %s26, 1
      %s1629 = scalar_select %p1628, %s26, 1
      %s1630 = smul.addr %s1629, 8
      %s1631 = scalar_lea.vmem %s9, %s1630
      %p1632 = scmp.lt.s32.totalorder %s26, 1
      %s1633 = scalar_select %p1632, %s26, 1
      %s1634 = smul.addr %s1633, 8
      %s1635 = scalar_lea.vmem %s10, %s1634
      // Predicated region
      $region57: #{nmt_decoder_ba_forward.1} parent=51 // pred_check
        %p1636 = pneg %p292
      $region58: #{nmt_decoder_ba_forward.1} parent=51 // pred_check_branch
        %1638 = sbr.rel (%p1636) target = $region60
      $region59: #{nmt_decoder_ba_forward.1} parent=51 // pred_region
        %s1639 = ssub.s32 1, %s26
        %s1640 = smul.u32 %s1639, %s27
        %s1641 = ssub.s32 0, %s27
        %s1642 = smul.u32 %s26, %s1641
        %s1643 = sadd.s32 %s1640, %s1642
        %s1644 = smul.u32 8, %s1643
      $region60: #{nmt_decoder_ba_forward.1} parent=51 // pred_fallthru
        _
      // Predicated region
      $region61: #{nmt_decoder_ba_forward.1} parent=51 // pred_check
        %p1645 = pneg %p318
      $region62: #{nmt_decoder_ba_forward.1} parent=51 // pred_check_branch
        %1647 = sbr.rel (%p1645) target = $region64
      $region63: #{nmt_decoder_ba_forward.1} parent=51 // pred_region
        _
      $region64: #{nmt_decoder_ba_forward.1} parent=51 // pred_fallthru
        _
      // Predicated region
      $region65: #{nmt_decoder_ba_forward.1} parent=51 // pred_check
        %p1648 = pneg %p344
      $region66: #{nmt_decoder_ba_forward.1} parent=51 // pred_check_branch
        %1650 = sbr.rel (%p1648) target = $region68
      $region67: #{nmt_decoder_ba_forward.1} parent=51 // pred_region
        _
      $region68: #{nmt_decoder_ba_forward.1} parent=51 // pred_fallthru
        _
    $region52: #{nmt_decoder_ba_forward.1} parent=5 // pred_fallthru
      _
    %p1651 = scmp.le.s32.totalorder 2, %s17
    // Predicated region
    $region69: #{nmt_decoder_ba_forward.1} parent=5 // pred_check
      %p1652 = pneg %p1651
    $region70: #{nmt_decoder_ba_forward.1} parent=5 // pred_check_branch
      %1654 = sbr.rel (%p1652) target = $region72
    $region71: #{nmt_decoder_ba_forward.1} parent=5 // pred_region
      %s1655 = ssub.s32 %s17, 2
      // Predicated region
      $region73: #{nmt_decoder_ba_forward.1} parent=71 // pred_check
        %p1656 = pneg %p298
      $region74: #{nmt_decoder_ba_forward.1} parent=71 // pred_check_branch
        %1658 = sbr.rel (%p1656) target = $region76
      $region75: #{nmt_decoder_ba_forward.1} parent=71 // pred_region
        %s1659 = ssub.s32 1, %s28
        %s1660 = smul.u32 %s1659, %s29
        %s1661 = ssub.s32 0, %s29
        %s1662 = smul.u32 %s28, %s1661
        %s1663 = sadd.s32 %s1660, %s1662
        %s1664 = smul.u32 8, %s1663
        %p1665 = scmp.lt.s32.totalorder %s28, 1
        %s1666 = scalar_select %p1665, %s28, 1
        %p1667 = scmp.lt.s32.totalorder %s1664, 7
        %s1668 = scalar_select %p1667, %s1664, 7
        %s1669 = smul.addr %s1666, 8
        %s1670 = sadd.s32 %s1668, %s1669
        %s1671 = smul.addr %s1670, 8
        %s1672 = scalar_lea.vmem %s8, %s1671
      $region76: #{nmt_decoder_ba_forward.1} parent=71 // pred_fallthru
        _
      // Predicated region
      $region77: #{nmt_decoder_ba_forward.1} parent=71 // pred_check
        %p1673 = pneg %p324
      $region78: #{nmt_decoder_ba_forward.1} parent=71 // pred_check_branch
        %1675 = sbr.rel (%p1673) target = $region80
      $region79: #{nmt_decoder_ba_forward.1} parent=71 // pred_region
        %p1676 = scmp.lt.s32.totalorder %s28, 1
        %s1677 = scalar_select %p1676, %s28, 1
        %s1678 = smul.addr %s1677, 8
        %s1679 = scalar_lea.vmem %s9, %s1678
      $region80: #{nmt_decoder_ba_forward.1} parent=71 // pred_fallthru
        _
      // Predicated region
      $region81: #{nmt_decoder_ba_forward.1} parent=71 // pred_check
        %p1680 = pneg %p350
      $region82: #{nmt_decoder_ba_forward.1} parent=71 // pred_check_branch
        %1682 = sbr.rel (%p1680) target = $region84
      $region83: #{nmt_decoder_ba_forward.1} parent=71 // pred_region
        %p1683 = scmp.lt.s32.totalorder %s28, 1
        %s1684 = scalar_select %p1683, %s28, 1
        %s1685 = smul.addr %s1684, 8
        %s1686 = scalar_lea.vmem %s10, %s1685
      $region84: #{nmt_decoder_ba_forward.1} parent=71 // pred_fallthru
        _
    $region72: #{nmt_decoder_ba_forward.1} parent=5 // pred_fallthru
      _
  $region6: #{nmt_decoder_ba_forward.1} parent=0 // loop_footer
    %s21 = sadd.s32 1, %s17
  $region7: #{nmt_decoder_ba_forward.1} parent=0 // loop_footer_branch
    %16 = sbr.rel target = $region3
  $region8: #{nmt_decoder_ba_forward.1} parent=0 // loop_exit
    _

</llo_original>
